<compile_context>
chip_gen: v5e
topology: v5e:2x2
jax: 0.10.0
libtpu: 0.0.40
codegen_flags: <defaults>
</compile_context>

<pallas_src>
import functools

import jax
import jax.numpy as jnp
from jax.experimental import pallas as pl
from jax.experimental.pallas import tpu as pltpu


def _round_up(x, m):
    return ((x + m - 1) // m) * m


def _pad_to(arr, shape):
    pads = [(0, s - d) for d, s in zip(arr.shape, shape)]
    return jnp.pad(arr, pads)


def gated_gcn_kernel(x_ref, adj_ref,
                     w_in_ref, b_in_ref,
                     w_cat_ref, b_cat_ref,
                     w_ih_ref, b_ih_ref,
                     w_out_ref, b_out_ref,
                     o_ref, *, n_steps, h_pad, agg_dtype):
    f32 = jnp.float32
    H = h_pad

    # Hoist all loads / casts / broadcasts out of the unrolled step loop.
    x = x_ref[...]
    adj = adj_ref[...].astype(agg_dtype)        # small integer edge counts: exact in bf16
    w_in, b_in = w_in_ref[...], b_in_ref[...]
    w_cat, b_cat = w_cat_ref[...], b_cat_ref[...]
    w_ih, b_ih = w_ih_ref[...], b_ih_ref[...]
    w_out, b_out = w_out_ref[...], b_out_ref[...]

    # linear_in + ReLU  (dropout == identity in eval mode).
    h = jnp.maximum(jnp.dot(x, w_in, preferred_element_type=f32) + b_in, 0.0)

    # GatedGraphConv: in_feats == out_feats == hidden_dim, so no zero-padding of h needed.
    for _ in range(n_steps):
        # Fused matmul: y = h @ [W_msg | W_hh_r | W_hh_z | W_hh_n]  (all 128-aligned blocks)
        y = jnp.dot(h, w_cat, preferred_element_type=f32) + b_cat
        m = y[:, 0:H]              # per-node message W_e h + b_e (single edge type)
        gh = y[:, H:4 * H]         # GRU hidden-side gates, ready before the a-chain

        # aggregate over in-edges: a_i = sum_j A[i, j] * m_j   (bf16 MXU, f32 accumulate)
        a = jnp.dot(adj, m.astype(agg_dtype), preferred_element_type=f32)

        # GRUCell(input=a, hidden=h); PyTorch gate order: r, z, n
        gi = jnp.dot(a, w_ih, preferred_element_type=f32) + b_ih
        r = jax.nn.sigmoid(gi[:, 0:H] + gh[:, 0:H])
        z = jax.nn.sigmoid(gi[:, H:2 * H] + gh[:, H:2 * H])
        n = jnp.tanh(gi[:, 2 * H:3 * H] + r * gh[:, 2 * H:3 * H])
        h = (1.0 - z) * n + z * h

    # linear_out (lane-dense padded store; wrapper slices back to the real out_dim).
    out = jnp.dot(h, w_out, preferred_element_type=f32) + b_out
    o_ref[...] = out.astype(o_ref.dtype)


def gated_gcn_forward(x, adj, params, *, n_steps=3, agg_dtype=jnp.bfloat16):
    N, F_in = x.shape
    H = params["w_msg"].shape[0]
    out_dim = params["w_out"].shape[0]

    LANE, SUB = 128, 8
    N_pad = _round_up(N, SUB)
    H_pad = _round_up(H, LANE)
    out_pad = _round_up(out_dim, LANE)

    # ---- zero-padded, pre-transposed parameters (torch (out,in) -> (in,out)) ----
    x_p = _pad_to(x.astype(jnp.float32), (N_pad, F_in))
    adj_p = _pad_to(adj.astype(jnp.float32), (N_pad, N_pad))

    w_in = _pad_to(params["w_in"].T, (F_in, H_pad))
    b_in = _pad_to(params["b_in"], (H_pad,))[None, :]

    def split_gates(w_t):   # w_t: (H, 3H), gate order r|z|n -> list of (H, H_pad)
        return [_pad_to(w_t[:, g * H:(g + 1) * H], (H, H_pad)) for g in range(3)]

    def split_gate_bias(b):  # (3H,) -> list of (H_pad,)
        return [_pad_to(b[g * H:(g + 1) * H], (H_pad,)) for g in range(3)]

    # Fused [W_msg | W_hh_r | W_hh_z | W_hh_n] : (H_pad, 4*H_pad)
    w_msg_p = _pad_to(params["w_msg"].T, (H, H_pad))
    w_cat = _pad_to(jnp.concatenate([w_msg_p] + split_gates(params["w_hh"].T), axis=1),
                    (H_pad, 4 * H_pad))
    b_cat = jnp.concatenate([_pad_to(params["b_msg"], (H_pad,))]
                            + split_gate_bias(params["b_hh"]))[None, :]

    w_ih = _pad_to(jnp.concatenate(split_gates(params["w_ih"].T), axis=1),
                   (H_pad, 3 * H_pad))
    b_ih = jnp.concatenate(split_gate_bias(params["b_ih"]))[None, :]

    w_out = _pad_to(params["w_out"].T, (H_pad, out_pad))
    b_out = _pad_to(params["b_out"], (out_pad,))[None, :]

    args = (x_p, adj_p, w_in, b_in, w_cat, b_cat, w_ih, b_ih, w_out, b_out)

    # Rough f32 VMEM budget with 2x headroom; never go below the 32 MiB default scoped
    # limit and cap at 64 MiB (v7x per-core VMEM).
    est = 4 * (N_pad * (F_in + N_pad + 8 * H_pad + out_pad)
               + F_in * H_pad + H_pad * (7 * H_pad + out_pad)
               + 8 * H_pad + out_pad)
    vmem_limit = min(max(2 * est, 32 * 1024 * 1024), 64 * 1024 * 1024)

    kernel = functools.partial(gated_gcn_kernel, n_steps=n_steps,
                               h_pad=H_pad, agg_dtype=agg_dtype)
    vmem_spec = lambda: pl.BlockSpec(memory_space=pltpu.MemorySpace.VMEM)
    out = pl.pallas_call(
        kernel,
        out_shape=jax.ShapeDtypeStruct((N_pad, out_pad), jnp.float32),
        in_specs=[vmem_spec() for _ in args],
        out_specs=vmem_spec(),
        compiler_params=pltpu.CompilerParams(vmem_limit_bytes=vmem_limit),
    )(*args)
    return out[:N, :out_dim]


def gated_gcn_reference(x, adj, params, *, n_steps=3):
    """Pure-JAX reference matching the PyTorch/DGL semantics (eval mode, f32)."""
    H = params["w_msg"].shape[0]
    h = jnp.maximum(x @ params["w_in"].T + params["b_in"], 0.0)
    for _ in range(n_steps):
        m = h @ params["w_msg"].T + params["b_msg"]
        a = adj @ m
        gi = a @ params["w_ih"].T + params["b_ih"]
        gh = h @ params["w_hh"].T + params["b_hh"]
        r = jax.nn.sigmoid(gi[:, 0:H] + gh[:, 0:H])
        z = jax.nn.sigmoid(gi[:, H:2 * H] + gh[:, H:2 * H])
        n = jnp.tanh(gi[:, 2 * H:3 * H] + r * gh[:, 2 * H:3 * H])
        h = (1.0 - z) * n + z * h
    return h @ params["w_out"].T + params["b_out"]


def init_params(key, in_feats, hidden_dim, out_dim):
    """Deterministic PyTorch-style uniform(-1/sqrt(fan_in), 1/sqrt(fan_in)) init."""
    def uniform(k, shape, fan_in):
        bound = 1.0 / jnp.sqrt(jnp.asarray(fan_in, jnp.float32))
        return jax.random.uniform(k, shape, jnp.float32, -bound, bound)

    ks = jax.random.split(key, 12)
    return {
        # nn.Linear(in_feats, hidden_dim)
        "w_in": uniform(ks[0], (hidden_dim, in_feats), in_feats),
        "b_in": uniform(ks[1], (hidden_dim,), in_feats),
        # GatedGraphConv.linears[0]: nn.Linear(hidden, hidden)
        "w_msg": uniform(ks[2], (hidden_dim, hidden_dim), hidden_dim),
        "b_msg": uniform(ks[3], (hidden_dim,), hidden_dim),
        # GRUCell(hidden, hidden): weight_ih (3H,H), weight_hh (3H,H), biases (3H,)
        "w_ih": uniform(ks[4], (3 * hidden_dim, hidden_dim), hidden_dim),
        "b_ih": uniform(ks[5], (3 * hidden_dim,), hidden_dim),
        "w_hh": uniform(ks[6], (3 * hidden_dim, hidden_dim), hidden_dim),
        "b_hh": uniform(ks[7], (3 * hidden_dim,), hidden_dim),
        # nn.Linear(hidden_dim, out_dim)
        "w_out": uniform(ks[8], (out_dim, hidden_dim), hidden_dim),
        "b_out": uniform(ks[9], (out_dim,), hidden_dim),
    }


if __name__ == "__main__":
    N_NODES = 64
    N_EDGES = 256
    IN_FEATS = 16
    HIDDEN = 32
    OUT_DIM = 8
    N_STEPS = 3

    key = jax.random.PRNGKey(0)
    k_x, k_src, k_dst, k_params = jax.random.split(key, 4)

    x = jax.random.normal(k_x, (N_NODES, IN_FEATS), jnp.float32)

    # Random directed graph -> dense adjacency A[i, j] = #edges j -> i
    src = jax.random.randint(k_src, (N_EDGES,), 0, N_NODES)
    dst = jax.random.randint(k_dst, (N_EDGES,), 0, N_NODES)
    adj = jnp.zeros((N_NODES, N_NODES), jnp.float32).at[dst, src].add(1.0)

    params = init_params(k_params, IN_FEATS, HIDDEN, OUT_DIM)

    ref = gated_gcn_reference(x, adj, params, n_steps=N_STEPS)

    # Fast path: bf16 aggregation operands, f32 accumulation.
    out = gated_gcn_forward(x, adj, params, n_steps=N_STEPS)
    out = jax.block_until_ready(out)
    assert out.shape == (N_NODES, OUT_DIM)
    assert jnp.allclose(out, ref, atol=1.5e-1, rtol=1e-1), "bf16-agg path mismatch vs reference"

    # Bit-faithful path: full f32 aggregation, tight tolerance.
    out_f32 = gated_gcn_forward(x, adj, params, n_steps=N_STEPS, agg_dtype=jnp.float32)
    out_f32 = jax.block_until_ready(out_f32)
    assert jnp.allclose(out_f32, ref, atol=1e-4, rtol=1e-4), "f32 path mismatch vs reference"

    print("KERNEL_OK")
</pallas_src>

<mosaic_0001>
module attributes {stable_mosaic.version = 11 : i64} {
  func.func @gated_gcn_kernel(%arg0: memref<64x16xf32, #tpu.memory_space<vmem>>, %arg1: memref<64x64xf32, #tpu.memory_space<vmem>>, %arg2: memref<16x128xf32, #tpu.memory_space<vmem>>, %arg3: memref<1x128xf32, #tpu.memory_space<vmem>>, %arg4: memref<128x512xf32, #tpu.memory_space<vmem>>, %arg5: memref<1x512xf32, #tpu.memory_space<vmem>>, %arg6: memref<128x384xf32, #tpu.memory_space<vmem>>, %arg7: memref<1x384xf32, #tpu.memory_space<vmem>>, %arg8: memref<128x128xf32, #tpu.memory_space<vmem>>, %arg9: memref<1x128xf32, #tpu.memory_space<vmem>>, %arg10: memref<64x128xf32, #tpu.memory_space<vmem>>) attributes {dimension_semantics = [], scalar_prefetch = 0 : i64, scratch_operands = 0 : i64, tpu.core_type = #tpu.core_type<tc>} {
    %c0 = arith.constant 0 : index
    %c0_0 = arith.constant 0 : index
    %0 = vector.load %arg0[%c0, %c0_0] : memref<64x16xf32, #tpu.memory_space<vmem>>, vector<64x16xf32>
    %c0_1 = arith.constant 0 : index
    %c0_2 = arith.constant 0 : index
    %1 = vector.load %arg1[%c0_1, %c0_2] : memref<64x64xf32, #tpu.memory_space<vmem>>, vector<64x64xf32>
    %2 = arith.truncf %1 : vector<64x64xf32> to vector<64x64xbf16>
    %c0_3 = arith.constant 0 : index
    %c0_4 = arith.constant 0 : index
    %3 = vector.load %arg2[%c0_3, %c0_4] : memref<16x128xf32, #tpu.memory_space<vmem>>, vector<16x128xf32>
    %c0_5 = arith.constant 0 : index
    %c0_6 = arith.constant 0 : index
    %4 = vector.load %arg3[%c0_5, %c0_6] : memref<1x128xf32, #tpu.memory_space<vmem>>, vector<1x128xf32>
    %c0_7 = arith.constant 0 : index
    %c0_8 = arith.constant 0 : index
    %5 = vector.load %arg4[%c0_7, %c0_8] : memref<128x512xf32, #tpu.memory_space<vmem>>, vector<128x512xf32>
    %c0_9 = arith.constant 0 : index
    %c0_10 = arith.constant 0 : index
    %6 = vector.load %arg5[%c0_9, %c0_10] : memref<1x512xf32, #tpu.memory_space<vmem>>, vector<1x512xf32>
    %c0_11 = arith.constant 0 : index
    %c0_12 = arith.constant 0 : index
    %7 = vector.load %arg6[%c0_11, %c0_12] : memref<128x384xf32, #tpu.memory_space<vmem>>, vector<128x384xf32>
    %c0_13 = arith.constant 0 : index
    %c0_14 = arith.constant 0 : index
    %8 = vector.load %arg7[%c0_13, %c0_14] : memref<1x384xf32, #tpu.memory_space<vmem>>, vector<1x384xf32>
    %c0_15 = arith.constant 0 : index
    %c0_16 = arith.constant 0 : index
    %9 = vector.load %arg8[%c0_15, %c0_16] : memref<128x128xf32, #tpu.memory_space<vmem>>, vector<128x128xf32>
    %c0_17 = arith.constant 0 : index
    %c0_18 = arith.constant 0 : index
    %10 = vector.load %arg9[%c0_17, %c0_18] : memref<1x128xf32, #tpu.memory_space<vmem>>, vector<1x128xf32>
    %cst = arith.constant dense<0.000000e+00> : vector<64x128xf32>
    %11 = tpu.matmul %0, %3, %cst {dimension_numbers = #tpu.dot_dimension_numbers<[1], [0], [0], [1], [0, 0, 1, 1], [], []>} : vector<64x16xf32>, vector<16x128xf32>, vector<64x128xf32> -> vector<64x128xf32>
    %12 = vector.broadcast %4 : vector<1x128xf32> to vector<64x128xf32>
    %13 = arith.addf %11, %12 : vector<64x128xf32>
    %cst_19 = arith.constant 0.000000e+00 : f32
    %14 = vector.broadcast %cst_19 : f32 to vector<64x128xf32>
    %15 = arith.maximumf %13, %14 : vector<64x128xf32>
    %cst_20 = arith.constant dense<0.000000e+00> : vector<64x512xf32>
    %16 = tpu.matmul %15, %5, %cst_20 {dimension_numbers = #tpu.dot_dimension_numbers<[1], [0], [0], [1], [0, 0, 1, 1], [], []>} : vector<64x128xf32>, vector<128x512xf32>, vector<64x512xf32> -> vector<64x512xf32>
    %17 = vector.broadcast %6 : vector<1x512xf32> to vector<64x512xf32>
    %18 = arith.addf %16, %17 : vector<64x512xf32>
    %19 = vector.extract_strided_slice %18 {offsets = [0, 0], sizes = [64, 128], strides = [1, 1]} : vector<64x512xf32> to vector<64x128xf32>
    %20 = vector.extract_strided_slice %18 {offsets = [0, 128], sizes = [64, 384], strides = [1, 1]} : vector<64x512xf32> to vector<64x384xf32>
    %21 = arith.truncf %19 : vector<64x128xf32> to vector<64x128xbf16>
    %cst_21 = arith.constant dense<0.000000e+00> : vector<64x128xf32>
    %22 = tpu.matmul %2, %21, %cst_21 {dimension_numbers = #tpu.dot_dimension_numbers<[1], [0], [0], [1], [0, 0, 1, 1], [], []>} : vector<64x64xbf16>, vector<64x128xbf16>, vector<64x128xf32> -> vector<64x128xf32>
    %cst_22 = arith.constant dense<0.000000e+00> : vector<64x384xf32>
    %23 = tpu.matmul %22, %7, %cst_22 {dimension_numbers = #tpu.dot_dimension_numbers<[1], [0], [0], [1], [0, 0, 1, 1], [], []>} : vector<64x128xf32>, vector<128x384xf32>, vector<64x384xf32> -> vector<64x384xf32>
    %24 = vector.broadcast %8 : vector<1x384xf32> to vector<64x384xf32>
    %25 = arith.addf %23, %24 : vector<64x384xf32>
    %26 = vector.extract_strided_slice %25 {offsets = [0, 0], sizes = [64, 128], strides = [1, 1]} : vector<64x384xf32> to vector<64x128xf32>
    %27 = vector.extract_strided_slice %20 {offsets = [0, 0], sizes = [64, 128], strides = [1, 1]} : vector<64x384xf32> to vector<64x128xf32>
    %28 = arith.addf %26, %27 : vector<64x128xf32>
    %29 = arith.negf %28 : vector<64x128xf32>
    %30 = math.exp %29 : vector<64x128xf32>
    %cst_23 = arith.constant 1.000000e+00 : f32
    %31 = vector.broadcast %cst_23 : f32 to vector<64x128xf32>
    %32 = arith.addf %31, %30 : vector<64x128xf32>
    %33 = arith.divf %31, %32 : vector<64x128xf32>
    %34 = vector.extract_strided_slice %25 {offsets = [0, 128], sizes = [64, 128], strides = [1, 1]} : vector<64x384xf32> to vector<64x128xf32>
    %35 = vector.extract_strided_slice %20 {offsets = [0, 128], sizes = [64, 128], strides = [1, 1]} : vector<64x384xf32> to vector<64x128xf32>
    %36 = arith.addf %34, %35 : vector<64x128xf32>
    %37 = arith.negf %36 : vector<64x128xf32>
    %38 = math.exp %37 : vector<64x128xf32>
    %cst_24 = arith.constant 1.000000e+00 : f32
    %39 = vector.broadcast %cst_24 : f32 to vector<64x128xf32>
    %40 = arith.addf %39, %38 : vector<64x128xf32>
    %41 = arith.divf %39, %40 : vector<64x128xf32>
    %42 = vector.extract_strided_slice %25 {offsets = [0, 256], sizes = [64, 128], strides = [1, 1]} : vector<64x384xf32> to vector<64x128xf32>
    %43 = vector.extract_strided_slice %20 {offsets = [0, 256], sizes = [64, 128], strides = [1, 1]} : vector<64x384xf32> to vector<64x128xf32>
    %44 = arith.mulf %33, %43 : vector<64x128xf32>
    %45 = arith.addf %42, %44 : vector<64x128xf32>
    %46 = math.tanh %45 : vector<64x128xf32>
    %cst_25 = arith.constant 1.000000e+00 : f32
    %47 = vector.broadcast %cst_25 : f32 to vector<64x128xf32>
    %48 = arith.subf %47, %41 : vector<64x128xf32>
    %49 = arith.mulf %48, %46 : vector<64x128xf32>
    %50 = arith.mulf %41, %15 : vector<64x128xf32>
    %51 = arith.addf %49, %50 : vector<64x128xf32>
    %cst_26 = arith.constant dense<0.000000e+00> : vector<64x512xf32>
    %52 = tpu.matmul %51, %5, %cst_26 {dimension_numbers = #tpu.dot_dimension_numbers<[1], [0], [0], [1], [0, 0, 1, 1], [], []>} : vector<64x128xf32>, vector<128x512xf32>, vector<64x512xf32> -> vector<64x512xf32>
    %53 = vector.broadcast %6 : vector<1x512xf32> to vector<64x512xf32>
    %54 = arith.addf %52, %53 : vector<64x512xf32>
    %55 = vector.extract_strided_slice %54 {offsets = [0, 0], sizes = [64, 128], strides = [1, 1]} : vector<64x512xf32> to vector<64x128xf32>
    %56 = vector.extract_strided_slice %54 {offsets = [0, 128], sizes = [64, 384], strides = [1, 1]} : vector<64x512xf32> to vector<64x384xf32>
    %57 = arith.truncf %55 : vector<64x128xf32> to vector<64x128xbf16>
    %cst_27 = arith.constant dense<0.000000e+00> : vector<64x128xf32>
    %58 = tpu.matmul %2, %57, %cst_27 {dimension_numbers = #tpu.dot_dimension_numbers<[1], [0], [0], [1], [0, 0, 1, 1], [], []>} : vector<64x64xbf16>, vector<64x128xbf16>, vector<64x128xf32> -> vector<64x128xf32>
    %cst_28 = arith.constant dense<0.000000e+00> : vector<64x384xf32>
    %59 = tpu.matmul %58, %7, %cst_28 {dimension_numbers = #tpu.dot_dimension_numbers<[1], [0], [0], [1], [0, 0, 1, 1], [], []>} : vector<64x128xf32>, vector<128x384xf32>, vector<64x384xf32> -> vector<64x384xf32>
    %60 = vector.broadcast %8 : vector<1x384xf32> to vector<64x384xf32>
    %61 = arith.addf %59, %60 : vector<64x384xf32>
    %62 = vector.extract_strided_slice %61 {offsets = [0, 0], sizes = [64, 128], strides = [1, 1]} : vector<64x384xf32> to vector<64x128xf32>
    %63 = vector.extract_strided_slice %56 {offsets = [0, 0], sizes = [64, 128], strides = [1, 1]} : vector<64x384xf32> to vector<64x128xf32>
    %64 = arith.addf %62, %63 : vector<64x128xf32>
    %65 = arith.negf %64 : vector<64x128xf32>
    %66 = math.exp %65 : vector<64x128xf32>
    %cst_29 = arith.constant 1.000000e+00 : f32
    %67 = vector.broadcast %cst_29 : f32 to vector<64x128xf32>
    %68 = arith.addf %67, %66 : vector<64x128xf32>
    %69 = arith.divf %67, %68 : vector<64x128xf32>
    %70 = vector.extract_strided_slice %61 {offsets = [0, 128], sizes = [64, 128], strides = [1, 1]} : vector<64x384xf32> to vector<64x128xf32>
    %71 = vector.extract_strided_slice %56 {offsets = [0, 128], sizes = [64, 128], strides = [1, 1]} : vector<64x384xf32> to vector<64x128xf32>
    %72 = arith.addf %70, %71 : vector<64x128xf32>
    %73 = arith.negf %72 : vector<64x128xf32>
    %74 = math.exp %73 : vector<64x128xf32>
    %cst_30 = arith.constant 1.000000e+00 : f32
    %75 = vector.broadcast %cst_30 : f32 to vector<64x128xf32>
    %76 = arith.addf %75, %74 : vector<64x128xf32>
    %77 = arith.divf %75, %76 : vector<64x128xf32>
    %78 = vector.extract_strided_slice %61 {offsets = [0, 256], sizes = [64, 128], strides = [1, 1]} : vector<64x384xf32> to vector<64x128xf32>
    %79 = vector.extract_strided_slice %56 {offsets = [0, 256], sizes = [64, 128], strides = [1, 1]} : vector<64x384xf32> to vector<64x128xf32>
    %80 = arith.mulf %69, %79 : vector<64x128xf32>
    %81 = arith.addf %78, %80 : vector<64x128xf32>
    %82 = math.tanh %81 : vector<64x128xf32>
    %cst_31 = arith.constant 1.000000e+00 : f32
    %83 = vector.broadcast %cst_31 : f32 to vector<64x128xf32>
    %84 = arith.subf %83, %77 : vector<64x128xf32>
    %85 = arith.mulf %84, %82 : vector<64x128xf32>
    %86 = arith.mulf %77, %51 : vector<64x128xf32>
    %87 = arith.addf %85, %86 : vector<64x128xf32>
    %cst_32 = arith.constant dense<0.000000e+00> : vector<64x512xf32>
    %88 = tpu.matmul %87, %5, %cst_32 {dimension_numbers = #tpu.dot_dimension_numbers<[1], [0], [0], [1], [0, 0, 1, 1], [], []>} : vector<64x128xf32>, vector<128x512xf32>, vector<64x512xf32> -> vector<64x512xf32>
    %89 = vector.broadcast %6 : vector<1x512xf32> to vector<64x512xf32>
    %90 = arith.addf %88, %89 : vector<64x512xf32>
    %91 = vector.extract_strided_slice %90 {offsets = [0, 0], sizes = [64, 128], strides = [1, 1]} : vector<64x512xf32> to vector<64x128xf32>
    %92 = vector.extract_strided_slice %90 {offsets = [0, 128], sizes = [64, 384], strides = [1, 1]} : vector<64x512xf32> to vector<64x384xf32>
    %93 = arith.truncf %91 : vector<64x128xf32> to vector<64x128xbf16>
    %cst_33 = arith.constant dense<0.000000e+00> : vector<64x128xf32>
    %94 = tpu.matmul %2, %93, %cst_33 {dimension_numbers = #tpu.dot_dimension_numbers<[1], [0], [0], [1], [0, 0, 1, 1], [], []>} : vector<64x64xbf16>, vector<64x128xbf16>, vector<64x128xf32> -> vector<64x128xf32>
    %cst_34 = arith.constant dense<0.000000e+00> : vector<64x384xf32>
    %95 = tpu.matmul %94, %7, %cst_34 {dimension_numbers = #tpu.dot_dimension_numbers<[1], [0], [0], [1], [0, 0, 1, 1], [], []>} : vector<64x128xf32>, vector<128x384xf32>, vector<64x384xf32> -> vector<64x384xf32>
    %96 = vector.broadcast %8 : vector<1x384xf32> to vector<64x384xf32>
    %97 = arith.addf %95, %96 : vector<64x384xf32>
    %98 = vector.extract_strided_slice %97 {offsets = [0, 0], sizes = [64, 128], strides = [1, 1]} : vector<64x384xf32> to vector<64x128xf32>
    %99 = vector.extract_strided_slice %92 {offsets = [0, 0], sizes = [64, 128], strides = [1, 1]} : vector<64x384xf32> to vector<64x128xf32>
    %100 = arith.addf %98, %99 : vector<64x128xf32>
    %101 = arith.negf %100 : vector<64x128xf32>
    %102 = math.exp %101 : vector<64x128xf32>
    %cst_35 = arith.constant 1.000000e+00 : f32
    %103 = vector.broadcast %cst_35 : f32 to vector<64x128xf32>
    %104 = arith.addf %103, %102 : vector<64x128xf32>
    %105 = arith.divf %103, %104 : vector<64x128xf32>
    %106 = vector.extract_strided_slice %97 {offsets = [0, 128], sizes = [64, 128], strides = [1, 1]} : vector<64x384xf32> to vector<64x128xf32>
    %107 = vector.extract_strided_slice %92 {offsets = [0, 128], sizes = [64, 128], strides = [1, 1]} : vector<64x384xf32> to vector<64x128xf32>
    %108 = arith.addf %106, %107 : vector<64x128xf32>
    %109 = arith.negf %108 : vector<64x128xf32>
    %110 = math.exp %109 : vector<64x128xf32>
    %cst_36 = arith.constant 1.000000e+00 : f32
    %111 = vector.broadcast %cst_36 : f32 to vector<64x128xf32>
    %112 = arith.addf %111, %110 : vector<64x128xf32>
    %113 = arith.divf %111, %112 : vector<64x128xf32>
    %114 = vector.extract_strided_slice %97 {offsets = [0, 256], sizes = [64, 128], strides = [1, 1]} : vector<64x384xf32> to vector<64x128xf32>
    %115 = vector.extract_strided_slice %92 {offsets = [0, 256], sizes = [64, 128], strides = [1, 1]} : vector<64x384xf32> to vector<64x128xf32>
    %116 = arith.mulf %105, %115 : vector<64x128xf32>
    %117 = arith.addf %114, %116 : vector<64x128xf32>
    %118 = math.tanh %117 : vector<64x128xf32>
    %cst_37 = arith.constant 1.000000e+00 : f32
    %119 = vector.broadcast %cst_37 : f32 to vector<64x128xf32>
    %120 = arith.subf %119, %113 : vector<64x128xf32>
    %121 = arith.mulf %120, %118 : vector<64x128xf32>
    %122 = arith.mulf %113, %87 : vector<64x128xf32>
    %123 = arith.addf %121, %122 : vector<64x128xf32>
    %cst_38 = arith.constant dense<0.000000e+00> : vector<64x128xf32>
    %124 = tpu.matmul %123, %9, %cst_38 {dimension_numbers = #tpu.dot_dimension_numbers<[1], [0], [0], [1], [0, 0, 1, 1], [], []>} : vector<64x128xf32>, vector<128x128xf32>, vector<64x128xf32> -> vector<64x128xf32>
    %125 = vector.broadcast %10 : vector<1x128xf32> to vector<64x128xf32>
    %126 = arith.addf %124, %125 : vector<64x128xf32>
    %c0_39 = arith.constant 0 : index
    %c0_40 = arith.constant 0 : index
    %127 = vector.load %arg10[%c0_39, %c0_40] : memref<64x128xf32, #tpu.memory_space<vmem>>, vector<64x128xf32>
    tpu.vector_store %arg10[%c0_39, %c0_40], %126 {strides = array<i32>} : memref<64x128xf32, #tpu.memory_space<vmem>>, vector<64x128xf32>,
    return
  }
}

</mosaic_0001>

<llo_original>
// kernel: tpu_custom_call.1
$region0: #{tpu_custom_call.1}
  #allocation0 [shape = 'u32[]', space=smem, size = 0x4, offset = 0x4, fixed_abs, tag = 'smem constant byte address 0x4 - core index']
  #allocation1 [shape = 'u32[72,128]{1,0:T(1,128)}', space=vmem, size = 0x9000, scoped, tag = 'internal scratch']
  %s0 = inlined_call_operand.vmem [shape: f32[64,16], index: 0, kind: input, shape index: {}]
  %s1 = inlined_call_operand.vmem [shape: f32[64,64], index: 1, kind: input, shape index: {}]
  %s2 = inlined_call_operand.vmem [shape: f32[16,128], index: 2, kind: input, shape index: {}]
  %s3 = inlined_call_operand.hbm [shape: f32[1,128], index: 3, kind: input, shape index: {}]
  %s4 = inlined_call_operand.hbm [shape: f32[128,512], index: 4, kind: input, shape index: {}]
  %s5 = inlined_call_operand.vmem [shape: f32[1,512], index: 5, kind: input, shape index: {}]
  %s6 = inlined_call_operand.hbm [shape: f32[128,384], index: 6, kind: input, shape index: {}]
  %s7 = inlined_call_operand.hbm [shape: f32[1,384], index: 7, kind: input, shape index: {}]
  %s8 = inlined_call_operand.hbm [shape: f32[128,128], index: 8, kind: input, shape index: {}]
  %s9 = inlined_call_operand.vmem [shape: f32[1,128], index: 9, kind: input, shape index: {}]
  %s10 = inlined_call_operand.hbm [shape: f32[64,128], index: 10, kind: output, shape index: {}]
  %s11 = sld [smem:[#allocation0]]
  $region70: #{tpu_custom_call.1} parent=0
    _
  %s13 = ssub.s32 1, %s11
  %s14 = scalar_select 0, %s13, %s11
  $region1: #{tpu_custom_call.1} parent=0
    #allocation2 [shape = 'u8[512]{0}', space=vmem, size = 0x400, scoped, tag = 'input window, operand 3, single buffered']
    #allocation3 [shape = 's32[1]{0}', space=sflag, size = 0x4, scoped, tag = 'scoped memory for tpu_custom_call.1']
    #allocation4 [shape = 's32[1]{0}', space=sflag, size = 0x4, scoped, tag = 'scoped memory for tpu_custom_call.1']
    #allocation5 [shape = 'u8[262144]{0}', space=vmem, size = 0x40000, scoped, tag = 'input window, operand 4, single buffered']
    #allocation6 [shape = 's32[1]{0}', space=sflag, size = 0x4, scoped, tag = 'scoped memory for tpu_custom_call.1']
    #allocation7 [shape = 'u8[196608]{0}', space=vmem, size = 0x30000, scoped, tag = 'input window, operand 6, single buffered']
    #allocation8 [shape = 'u8[1536]{0}', space=vmem, size = 0x800, scoped, tag = 'input window, operand 7, single buffered']
    #allocation9 [shape = 's32[1]{0}', space=sflag, size = 0x4, scoped, tag = 'scoped memory for tpu_custom_call.1']
    #allocation10 [shape = 'u8[65536]{0}', space=vmem, size = 0x10000, scoped, tag = 'input window, operand 8, single buffered']
    #allocation11 [shape = 'u8[32768]{0}', space=vmem, size = 0x8000, scoped, tag = 'output window, operand 0, single buffered']
    %15 = vsyncpa [#allocation3], 0
    %16 = vsyncpa [#allocation6], 0
    %17 = vsyncpa [#allocation9], 0
    %18 = vsyncpa [#allocation4], 0
    // Predicated region
    $region2: #{tpu_custom_call.1} parent=1 // pred_check
      _
    $region3: #{tpu_custom_call.1} parent=1 // pred_check_branch
      %20 = sbr.rel (0) target = $region5
    $region4: #{tpu_custom_call.1} parent=1 // pred_region
      _
    $region5: #{tpu_custom_call.1} parent=1 // pred_fallthru
      _
    // Predicated region
    $region6: #{tpu_custom_call.1} parent=1 // pred_check
      _
    $region7: #{tpu_custom_call.1} parent=1 // pred_check_branch
      %22 = sbr.rel (0) target = $region9
    $region8: #{tpu_custom_call.1} parent=1 // pred_region
      _
    $region9: #{tpu_custom_call.1} parent=1 // pred_fallthru
      _
    // Predicated region
    $region10: #{tpu_custom_call.1} parent=1 // pred_check
      _
    $region11: #{tpu_custom_call.1} parent=1 // pred_check_branch
      %24 = sbr.rel (0) target = $region13
    $region12: #{tpu_custom_call.1} parent=1 // pred_region
      _
    $region13: #{tpu_custom_call.1} parent=1 // pred_fallthru
      _
    // Predicated region
    $region14: #{tpu_custom_call.1} parent=1 // pred_check
      _
    $region15: #{tpu_custom_call.1} parent=1 // pred_check_branch
      %26 = sbr.rel (0) target = $region17
    $region16: #{tpu_custom_call.1} parent=1 // pred_region
      %28 = vsyncadd [#allocation3], 0
      %s30 = sshll.u32 %s3, 4
      %s31 = int_to_ptr.hbm [resolvable:$true] %s30
      %s32 = sshll.u32 [#allocation2], 4
      %s33 = int_to_ptr.vmem [resolvable:$true] %s32
      %35 = dma.hbm_to_vmem [thread:$0]  %s31, 16, %s33, [#allocation3]
    $region17: #{tpu_custom_call.1} parent=1 // pred_fallthru
      _
    // Predicated region
    $region18: #{tpu_custom_call.1} parent=1 // pred_check
      _
    $region19: #{tpu_custom_call.1} parent=1 // pred_check_branch
      %37 = sbr.rel (0) target = $region21
    $region20: #{tpu_custom_call.1} parent=1 // pred_region
      %39 = vsyncadd [#allocation6], 0
      %s40 = sshll.u32 %s4, 4
      %s41 = int_to_ptr.hbm [resolvable:$true] %s40
      %s42 = sshll.u32 [#allocation5], 4
      %s43 = int_to_ptr.vmem [resolvable:$true] %s42
      %48 = dma.hbm_to_vmem [thread:$0]  %s41, 8192, %s43, [#allocation6], 512, 512, 32
    $region21: #{tpu_custom_call.1} parent=1 // pred_fallthru
      _
    // Predicated region
    $region22: #{tpu_custom_call.1} parent=1 // pred_check
      _
    $region23: #{tpu_custom_call.1} parent=1 // pred_check_branch
      %50 = sbr.rel (0) target = $region25
    $region24: #{tpu_custom_call.1} parent=1 // pred_region
      _
    $region25: #{tpu_custom_call.1} parent=1 // pred_fallthru
      _
    // Predicated region
    $region26: #{tpu_custom_call.1} parent=1 // pred_check
      _
    $region27: #{tpu_custom_call.1} parent=1 // pred_check_branch
      %52 = sbr.rel (0) target = $region29
    $region28: #{tpu_custom_call.1} parent=1 // pred_region
      %54 = vsyncadd [#allocation6], 0
      %s55 = sshll.u32 %s6, 4
      %s56 = int_to_ptr.hbm [resolvable:$true] %s55
      %s57 = sshll.u32 [#allocation7], 4
      %s58 = int_to_ptr.vmem [resolvable:$true] %s57
      %63 = dma.hbm_to_vmem [thread:$0]  %s56, 6144, %s58, [#allocation6], 384, 384, 24
    $region29: #{tpu_custom_call.1} parent=1 // pred_fallthru
      _
    // Predicated region
    $region30: #{tpu_custom_call.1} parent=1 // pred_check
      _
    $region31: #{tpu_custom_call.1} parent=1 // pred_check_branch
      %65 = sbr.rel (0) target = $region33
    $region32: #{tpu_custom_call.1} parent=1 // pred_region
      %67 = vsyncadd [#allocation9], 0
      %s69 = sshll.u32 %s7, 4
      %s70 = int_to_ptr.hbm [resolvable:$true] %s69
      %s71 = sshll.u32 [#allocation8], 4
      %s72 = int_to_ptr.vmem [resolvable:$true] %s71
      %74 = dma.hbm_to_vmem [thread:$0]  %s70, 48, %s72, [#allocation9]
    $region33: #{tpu_custom_call.1} parent=1 // pred_fallthru
      _
    // Predicated region
    $region34: #{tpu_custom_call.1} parent=1 // pred_check
      _
    $region35: #{tpu_custom_call.1} parent=1 // pred_check_branch
      %76 = sbr.rel (0) target = $region37
    $region36: #{tpu_custom_call.1} parent=1 // pred_region
      %78 = vsyncadd [#allocation9], 0
      %s79 = sshll.u32 %s8, 4
      %s80 = int_to_ptr.hbm [resolvable:$true] %s79
      %s81 = sshll.u32 [#allocation10], 4
      %s82 = int_to_ptr.vmem [resolvable:$true] %s81
      %87 = dma.hbm_to_vmem [thread:$0]  %s80, 2048, %s82, [#allocation9], 128, 128, 8
    $region37: #{tpu_custom_call.1} parent=1 // pred_fallthru
      _
    // Predicated region
    $region38: #{tpu_custom_call.1} parent=1 // pred_check
      _
    $region39: #{tpu_custom_call.1} parent=1 // pred_check_branch
      %89 = sbr.rel (0) target = $region41
    $region40: #{tpu_custom_call.1} parent=1 // pred_region
      _
    $region41: #{tpu_custom_call.1} parent=1 // pred_fallthru
      _
    // Predicated region
    $region42: #{tpu_custom_call.1} parent=1 // pred_check
      _
    $region43: #{tpu_custom_call.1} parent=1 // pred_check_branch
      %91 = sbr.rel (0) target = $region45
    $region44: #{tpu_custom_call.1} parent=1 // pred_region
      %93 = dma.done [#allocation3], 16
    $region45: #{tpu_custom_call.1} parent=1 // pred_fallthru
      _
    // Predicated region
    $region46: #{tpu_custom_call.1} parent=1 // pred_check
      _
    $region47: #{tpu_custom_call.1} parent=1 // pred_check_branch
      %95 = sbr.rel (0) target = $region49
    $region48: #{tpu_custom_call.1} parent=1 // pred_region
      %97 = dma.done [#allocation6], 8192
    $region49: #{tpu_custom_call.1} parent=1 // pred_fallthru
      _
    // Predicated region
    $region50: #{tpu_custom_call.1} parent=1 // pred_check
      _
    $region51: #{tpu_custom_call.1} parent=1 // pred_check_branch
      %99 = sbr.rel (0) target = $region53
    $region52: #{tpu_custom_call.1} parent=1 // pred_region
      %101 = dma.done [#allocation6], 6144
    $region53: #{tpu_custom_call.1} parent=1 // pred_fallthru
      _
    // Predicated region
    $region54: #{tpu_custom_call.1} parent=1 // pred_check
      _
    $region55: #{tpu_custom_call.1} parent=1 // pred_check_branch
      %103 = sbr.rel (0) target = $region57
    $region56: #{tpu_custom_call.1} parent=1 // pred_region
      %105 = dma.done [#allocation9], 48
    $region57: #{tpu_custom_call.1} parent=1 // pred_fallthru
      _
    // Predicated region
    $region58: #{tpu_custom_call.1} parent=1 // pred_check
      _
    $region59: #{tpu_custom_call.1} parent=1 // pred_check_branch
      %107 = sbr.rel (0) target = $region61
    $region60: #{tpu_custom_call.1} parent=1 // pred_region
      %109 = dma.done [#allocation9], 2048
    $region61: #{tpu_custom_call.1} parent=1 // pred_fallthru
      _
    %v111 = vld [vmem:[%s0] sm:$0xff]
    %v112 = vld [vmem:[%s0 + $0x8] sm:$0xff]
    %v113 = vld [vmem:[%s0 + $0x10] sm:$0xff]
    %v114 = vld [vmem:[%s0 + $0x18] sm:$0xff]
    %v115 = vld [vmem:[%s0 + $0x20] sm:$0xff]
    %v116 = vld [vmem:[%s0 + $0x28] sm:$0xff]
    %v117 = vld [vmem:[%s0 + $0x30] sm:$0xff]
    %v118 = vld [vmem:[%s0 + $0x38] sm:$0xff]
    %v119 = vld [vmem:[%s1] sm:$0xff]
    %v120 = vld [vmem:[%s1 + $0x8] sm:$0xff]
    %v121 = vld [vmem:[%s1 + $0x10] sm:$0xff]
    %v122 = vld [vmem:[%s1 + $0x18] sm:$0xff]
    %v123 = vld [vmem:[%s1 + $0x20] sm:$0xff]
    %v124 = vld [vmem:[%s1 + $0x28] sm:$0xff]
    %v125 = vld [vmem:[%s1 + $0x30] sm:$0xff]
    %v126 = vld [vmem:[%s1 + $0x38] sm:$0xff]
    %v127 = vpack.c.bf16 %v120, %v119
    %v128 = vpack.c.bf16 %v122, %v121
    %v129 = vpack.c.bf16 %v124, %v123
    %v130 = vpack.c.bf16 %v126, %v125
    %v131 = vld [vmem:[%s2] sm:$0xff]
    %v132 = vld [vmem:[%s2 + $0x8] sm:$0xff]
    %v133 = vld [vmem:[#allocation2] sm:$0x1]
    %v134 = vld [vmem:[#allocation5] sm:$0xff]
    %v135 = vld [vmem:[#allocation5 + $0x8] sm:$0xff]
    %v136 = vld [vmem:[#allocation5 + $0x10] sm:$0xff]
    %v137 = vld [vmem:[#allocation5 + $0x18] sm:$0xff]
    %v138 = vld [vmem:[#allocation5 + $0x20] sm:$0xff]
    %v139 = vld [vmem:[#allocation5 + $0x28] sm:$0xff]
    %v140 = vld [vmem:[#allocation5 + $0x30] sm:$0xff]
    %v141 = vld [vmem:[#allocation5 + $0x38] sm:$0xff]
    %v142 = vld [vmem:[#allocation5 + $0x40] sm:$0xff]
    %v143 = vld [vmem:[#allocation5 + $0x48] sm:$0xff]
    %v144 = vld [vmem:[#allocation5 + $0x50] sm:$0xff]
    %v145 = vld [vmem:[#allocation5 + $0x58] sm:$0xff]
    %v146 = vld [vmem:[#allocation5 + $0x60] sm:$0xff]
    %v147 = vld [vmem:[#allocation5 + $0x68] sm:$0xff]
    %v148 = vld [vmem:[#allocation5 + $0x70] sm:$0xff]
    %v149 = vld [vmem:[#allocation5 + $0x78] sm:$0xff]
    %v150 = vld [vmem:[#allocation5 + $0x80] sm:$0xff]
    %v151 = vld [vmem:[#allocation5 + $0x88] sm:$0xff]
    %v152 = vld [vmem:[#allocation5 + $0x90] sm:$0xff]
    %v153 = vld [vmem:[#allocation5 + $0x98] sm:$0xff]
    %v154 = vld [vmem:[#allocation5 + $0xa0] sm:$0xff]
    %v155 = vld [vmem:[#allocation5 + $0xa8] sm:$0xff]
    %v156 = vld [vmem:[#allocation5 + $0xb0] sm:$0xff]
    %v157 = vld [vmem:[#allocation5 + $0xb8] sm:$0xff]
    %v158 = vld [vmem:[#allocation5 + $0xc0] sm:$0xff]
    %v159 = vld [vmem:[#allocation5 + $0xc8] sm:$0xff]
    %v160 = vld [vmem:[#allocation5 + $0xd0] sm:$0xff]
    %v161 = vld [vmem:[#allocation5 + $0xd8] sm:$0xff]
    %v162 = vld [vmem:[#allocation5 + $0xe0] sm:$0xff]
    %v163 = vld [vmem:[#allocation5 + $0xe8] sm:$0xff]
    %v164 = vld [vmem:[#allocation5 + $0xf0] sm:$0xff]
    %v165 = vld [vmem:[#allocation5 + $0xf8] sm:$0xff]
    %v166 = vld [vmem:[#allocation5 + $0x100] sm:$0xff]
    %v167 = vld [vmem:[#allocation5 + $0x108] sm:$0xff]
    %v168 = vld [vmem:[#allocation5 + $0x110] sm:$0xff]
    %v169 = vld [vmem:[#allocation5 + $0x118] sm:$0xff]
    %v170 = vld [vmem:[#allocation5 + $0x120] sm:$0xff]
    %v171 = vld [vmem:[#allocation5 + $0x128] sm:$0xff]
    %v172 = vld [vmem:[#allocation5 + $0x130] sm:$0xff]
    %v173 = vld [vmem:[#allocation5 + $0x138] sm:$0xff]
    %v174 = vld [vmem:[#allocation5 + $0x140] sm:$0xff]
    %v175 = vld [vmem:[#allocation5 + $0x148] sm:$0xff]
    %v176 = vld [vmem:[#allocation5 + $0x150] sm:$0xff]
    %v177 = vld [vmem:[#allocation5 + $0x158] sm:$0xff]
    %v178 = vld [vmem:[#allocation5 + $0x160] sm:$0xff]
    %v179 = vld [vmem:[#allocation5 + $0x168] sm:$0xff]
    %v180 = vld [vmem:[#allocation5 + $0x170] sm:$0xff]
    %v181 = vld [vmem:[#allocation5 + $0x178] sm:$0xff]
    %v182 = vld [vmem:[#allocation5 + $0x180] sm:$0xff]
    %v183 = vld [vmem:[#allocation5 + $0x188] sm:$0xff]
    %v184 = vld [vmem:[#allocation5 + $0x190] sm:$0xff]
    %v185 = vld [vmem:[#allocation5 + $0x198] sm:$0xff]
    %v186 = vld [vmem:[#allocation5 + $0x1a0] sm:$0xff]
    %v187 = vld [vmem:[#allocation5 + $0x1a8] sm:$0xff]
    %v188 = vld [vmem:[#allocation5 + $0x1b0] sm:$0xff]
    %v189 = vld [vmem:[#allocation5 + $0x1b8] sm:$0xff]
    %v190 = vld [vmem:[#allocation5 + $0x1c0] sm:$0xff]
    %v191 = vld [vmem:[#allocation5 + $0x1c8] sm:$0xff]
    %v192 = vld [vmem:[#allocation5 + $0x1d0] sm:$0xff]
    %v193 = vld [vmem:[#allocation5 + $0x1d8] sm:$0xff]
    %v194 = vld [vmem:[#allocation5 + $0x1e0] sm:$0xff]
    %v195 = vld [vmem:[#allocation5 + $0x1e8] sm:$0xff]
    %v196 = vld [vmem:[#allocation5 + $0x1f0] sm:$0xff]
    %v197 = vld [vmem:[#allocation5 + $0x1f8] sm:$0xff]
    %v198 = vld [vmem:[%s5] sm:$0xf]
    %v199 = vld [vmem:[#allocation7] sm:$0xff]
    %v200 = vld [vmem:[#allocation7 + $0x8] sm:$0xff]
    %v201 = vld [vmem:[#allocation7 + $0x10] sm:$0xff]
    %v202 = vld [vmem:[#allocation7 + $0x18] sm:$0xff]
    %v203 = vld [vmem:[#allocation7 + $0x20] sm:$0xff]
    %v204 = vld [vmem:[#allocation7 + $0x28] sm:$0xff]
    %v205 = vld [vmem:[#allocation7 + $0x30] sm:$0xff]
    %v206 = vld [vmem:[#allocation7 + $0x38] sm:$0xff]
    %v207 = vld [vmem:[#allocation7 + $0x40] sm:$0xff]
    %v208 = vld [vmem:[#allocation7 + $0x48] sm:$0xff]
    %v209 = vld [vmem:[#allocation7 + $0x50] sm:$0xff]
    %v210 = vld [vmem:[#allocation7 + $0x58] sm:$0xff]
    %v211 = vld [vmem:[#allocation7 + $0x60] sm:$0xff]
    %v212 = vld [vmem:[#allocation7 + $0x68] sm:$0xff]
    %v213 = vld [vmem:[#allocation7 + $0x70] sm:$0xff]
    %v214 = vld [vmem:[#allocation7 + $0x78] sm:$0xff]
    %v215 = vld [vmem:[#allocation7 + $0x80] sm:$0xff]
    %v216 = vld [vmem:[#allocation7 + $0x88] sm:$0xff]
    %v217 = vld [vmem:[#allocation7 + $0x90] sm:$0xff]
    %v218 = vld [vmem:[#allocation7 + $0x98] sm:$0xff]
    %v219 = vld [vmem:[#allocation7 + $0xa0] sm:$0xff]
    %v220 = vld [vmem:[#allocation7 + $0xa8] sm:$0xff]
    %v221 = vld [vmem:[#allocation7 + $0xb0] sm:$0xff]
    %v222 = vld [vmem:[#allocation7 + $0xb8] sm:$0xff]
    %v223 = vld [vmem:[#allocation7 + $0xc0] sm:$0xff]
    %v224 = vld [vmem:[#allocation7 + $0xc8] sm:$0xff]
    %v225 = vld [vmem:[#allocation7 + $0xd0] sm:$0xff]
    %v226 = vld [vmem:[#allocation7 + $0xd8] sm:$0xff]
    %v227 = vld [vmem:[#allocation7 + $0xe0] sm:$0xff]
    %v228 = vld [vmem:[#allocation7 + $0xe8] sm:$0xff]
    %v229 = vld [vmem:[#allocation7 + $0xf0] sm:$0xff]
    %v230 = vld [vmem:[#allocation7 + $0xf8] sm:$0xff]
    %v231 = vld [vmem:[#allocation7 + $0x100] sm:$0xff]
    %v232 = vld [vmem:[#allocation7 + $0x108] sm:$0xff]
    %v233 = vld [vmem:[#allocation7 + $0x110] sm:$0xff]
    %v234 = vld [vmem:[#allocation7 + $0x118] sm:$0xff]
    %v235 = vld [vmem:[#allocation7 + $0x120] sm:$0xff]
    %v236 = vld [vmem:[#allocation7 + $0x128] sm:$0xff]
    %v237 = vld [vmem:[#allocation7 + $0x130] sm:$0xff]
    %v238 = vld [vmem:[#allocation7 + $0x138] sm:$0xff]
    %v239 = vld [vmem:[#allocation7 + $0x140] sm:$0xff]
    %v240 = vld [vmem:[#allocation7 + $0x148] sm:$0xff]
    %v241 = vld [vmem:[#allocation7 + $0x150] sm:$0xff]
    %v242 = vld [vmem:[#allocation7 + $0x158] sm:$0xff]
    %v243 = vld [vmem:[#allocation7 + $0x160] sm:$0xff]
    %v244 = vld [vmem:[#allocation7 + $0x168] sm:$0xff]
    %v245 = vld [vmem:[#allocation7 + $0x170] sm:$0xff]
    %v246 = vld [vmem:[#allocation7 + $0x178] sm:$0xff]
    %v247 = vld [vmem:[#allocation8] sm:$0x7]
    %v248 = vld [vmem:[#allocation10] sm:$0xff]
    %v249 = vld [vmem:[#allocation10 + $0x8] sm:$0xff]
    %v250 = vld [vmem:[#allocation10 + $0x10] sm:$0xff]
    %v251 = vld [vmem:[#allocation10 + $0x18] sm:$0xff]
    %v252 = vld [vmem:[#allocation10 + $0x20] sm:$0xff]
    %v253 = vld [vmem:[#allocation10 + $0x28] sm:$0xff]
    %v254 = vld [vmem:[#allocation10 + $0x30] sm:$0xff]
    %v255 = vld [vmem:[#allocation10 + $0x38] sm:$0xff]
    %v256 = vld [vmem:[#allocation10 + $0x40] sm:$0xff]
    %v257 = vld [vmem:[#allocation10 + $0x48] sm:$0xff]
    %v258 = vld [vmem:[#allocation10 + $0x50] sm:$0xff]
    %v259 = vld [vmem:[#allocation10 + $0x58] sm:$0xff]
    %v260 = vld [vmem:[#allocation10 + $0x60] sm:$0xff]
    %v261 = vld [vmem:[#allocation10 + $0x68] sm:$0xff]
    %v262 = vld [vmem:[#allocation10 + $0x70] sm:$0xff]
    %v263 = vld [vmem:[#allocation10 + $0x78] sm:$0xff]
    %v264 = vld [vmem:[%s9] sm:$0x1]
    %v266 = vperm.slane %v133, 0
    %vm268 = vcmask 130048
    %v270 = vsel %vm268, %v111, 0
    %v273 = vsel %vm268, %v112, 0
    %v276 = vsel %vm268, %v113, 0
    %v279 = vsel %vm268, %v114, 0
    %v282 = vsel %vm268, %v115, 0
    %v285 = vsel %vm268, %v116, 0
    %v288 = vsel %vm268, %v117, 0
    %v291 = vsel %vm268, %v118, 0
    %293 = vmatpush.msra.mxu0 0.0
    %294 = vmatpush.msra.mxu0 0.0
    %295 = vmatpush.msra.mxu0 0.0
    %296 = vmatpush.msra.mxu0 0.0
    %297 = vmatpush.msra.mxu0 0.0
    %298 = vmatpush.msra.mxu0 0.0
    %299 = vmatpush.msra.mxu0 0.0
    %300 = vmatpush.msra.mxu0 0.0
    %301 = vmatpush.msra.mxu0 0.0
    %302 = vmatpush.msra.mxu0 0.0
    %303 = vmatpush.msra.mxu0 0.0
    %304 = vmatpush.msra.mxu0 0.0
    %305 = vmatpush.msra.mxu0 0.0
    %306 = vmatpush.msra.mxu0 0.0
    %307 = vmatpush.msra.mxu0 %v132
    %308 = vmatpush.msra.mxu0 %v131
    %309 = vmatmul.f32.gmra.mxu0 %v270
    %v310 = vpop.f32.mrf.mxu0
    %v311 = vadd.f32 %v266, %v310
    %312 = vmatmul.f32.gmra.mxu0 %v273
    %v313 = vpop.f32.mrf.mxu0
    %v314 = vadd.f32 %v266, %v313
    %315 = vmatmul.f32.gmra.mxu0 %v276
    %v316 = vpop.f32.mrf.mxu0
    %v317 = vadd.f32 %v266, %v316
    %318 = vmatmul.f32.gmra.mxu0 %v279
    %v319 = vpop.f32.mrf.mxu0
    %v320 = vadd.f32 %v266, %v319
    %321 = vmatmul.f32.gmra.mxu0 %v282
    %v322 = vpop.f32.mrf.mxu0
    %v323 = vadd.f32 %v266, %v322
    %324 = vmatmul.f32.gmra.mxu0 %v285
    %v325 = vpop.f32.mrf.mxu0
    %v326 = vadd.f32 %v266, %v325
    %327 = vmatmul.f32.gmra.mxu0 %v288
    %v328 = vpop.f32.mrf.mxu0
    %v329 = vadd.f32 %v266, %v328
    %330 = vmatmul.f32.gmra.mxu0 %v291
    %v331 = vpop.f32.mrf.mxu0
    %v332 = vadd.f32 %v266, %v331
    %333 = vdwg.mxu0
    %v334 = vmax.f32 %v311, 0.0
    %v335 = vmax.f32 %v314, 0.0
    %v336 = vmax.f32 %v317, 0.0
    %v337 = vmax.f32 %v320, 0.0
    %v338 = vmax.f32 %v323, 0.0
    %v339 = vmax.f32 %v326, 0.0
    %v340 = vmax.f32 %v329, 0.0
    %v341 = vmax.f32 %v332, 0.0
    %v343 = vperm.slane %v198, 0
    %v344 = vperm.slane %v198, 1
    %v345 = vperm.slane %v198, 2
    %v346 = vperm.slane %v198, 3
    %351 = vmatpush.msra.mxu0 %v194
    %352 = vmatpush.msra.mxu0 %v190
    %353 = vmatpush.msra.mxu0 %v186
    %354 = vmatpush.msra.mxu0 %v182
    %355 = vmatpush.msra.mxu0 %v178
    %356 = vmatpush.msra.mxu0 %v174
    %357 = vmatpush.msra.mxu0 %v170
    %358 = vmatpush.msra.mxu0 %v166
    %359 = vmatpush.msra.mxu0 %v162
    %360 = vmatpush.msra.mxu0 %v158
    %361 = vmatpush.msra.mxu0 %v154
    %362 = vmatpush.msra.mxu0 %v150
    %363 = vmatpush.msra.mxu0 %v146
    %364 = vmatpush.msra.mxu0 %v142
    %365 = vmatpush.msra.mxu0 %v138
    %366 = vmatpush.msra.mxu0 %v134
    %367 = vmatmul.f32.gmra.mxu0 %v334
    %v368 = vpop.f32.mrf.mxu0
    %v369 = vadd.f32 %v343, %v368
    %370 = vmatmul.f32.gmra.mxu0 %v335
    %v371 = vpop.f32.mrf.mxu0
    %v372 = vadd.f32 %v343, %v371
    %373 = vmatmul.f32.gmra.mxu0 %v336
    %v374 = vpop.f32.mrf.mxu0
    %v375 = vadd.f32 %v343, %v374
    %376 = vmatmul.f32.gmra.mxu0 %v337
    %v377 = vpop.f32.mrf.mxu0
    %v378 = vadd.f32 %v343, %v377
    %379 = vmatmul.f32.gmra.mxu0 %v338
    %v380 = vpop.f32.mrf.mxu0
    %v381 = vadd.f32 %v343, %v380
    %382 = vmatmul.f32.gmra.mxu0 %v339
    %v383 = vpop.f32.mrf.mxu0
    %v384 = vadd.f32 %v343, %v383
    %385 = vmatmul.f32.gmra.mxu0 %v340
    %v386 = vpop.f32.mrf.mxu0
    %v387 = vadd.f32 %v343, %v386
    %388 = vmatmul.f32.gmra.mxu0 %v341
    %v389 = vpop.f32.mrf.mxu0
    %v390 = vadd.f32 %v343, %v389
    %391 = vdwg.mxu0
    %392 = vmatpush.msra.mxu0 %v195
    %393 = vmatpush.msra.mxu0 %v191
    %394 = vmatpush.msra.mxu0 %v187
    %395 = vmatpush.msra.mxu0 %v183
    %396 = vmatpush.msra.mxu0 %v179
    %397 = vmatpush.msra.mxu0 %v175
    %398 = vmatpush.msra.mxu0 %v171
    %399 = vmatpush.msra.mxu0 %v167
    %400 = vmatpush.msra.mxu0 %v163
    %401 = vmatpush.msra.mxu0 %v159
    %402 = vmatpush.msra.mxu0 %v155
    %403 = vmatpush.msra.mxu0 %v151
    %404 = vmatpush.msra.mxu0 %v147
    %405 = vmatpush.msra.mxu0 %v143
    %406 = vmatpush.msra.mxu0 %v139
    %407 = vmatpush.msra.mxu0 %v135
    %408 = vmatmul.f32.gmra.mxu0 %v334
    %v409 = vpop.f32.mrf.mxu0
    %v410 = vadd.f32 %v344, %v409
    %411 = vmatmul.f32.gmra.mxu0 %v335
    %v412 = vpop.f32.mrf.mxu0
    %v413 = vadd.f32 %v344, %v412
    %414 = vmatmul.f32.gmra.mxu0 %v336
    %v415 = vpop.f32.mrf.mxu0
    %v416 = vadd.f32 %v344, %v415
    %417 = vmatmul.f32.gmra.mxu0 %v337
    %v418 = vpop.f32.mrf.mxu0
    %v419 = vadd.f32 %v344, %v418
    %420 = vmatmul.f32.gmra.mxu0 %v338
    %v421 = vpop.f32.mrf.mxu0
    %v422 = vadd.f32 %v344, %v421
    %423 = vmatmul.f32.gmra.mxu0 %v339
    %v424 = vpop.f32.mrf.mxu0
    %v425 = vadd.f32 %v344, %v424
    %426 = vmatmul.f32.gmra.mxu0 %v340
    %v427 = vpop.f32.mrf.mxu0
    %v428 = vadd.f32 %v344, %v427
    %429 = vmatmul.f32.gmra.mxu0 %v341
    %v430 = vpop.f32.mrf.mxu0
    %v431 = vadd.f32 %v344, %v430
    %432 = vdwg.mxu0
    %433 = vmatpush.msra.mxu0 %v196
    %434 = vmatpush.msra.mxu0 %v192
    %435 = vmatpush.msra.mxu0 %v188
    %436 = vmatpush.msra.mxu0 %v184
    %437 = vmatpush.msra.mxu0 %v180
    %438 = vmatpush.msra.mxu0 %v176
    %439 = vmatpush.msra.mxu0 %v172
    %440 = vmatpush.msra.mxu0 %v168
    %441 = vmatpush.msra.mxu0 %v164
    %442 = vmatpush.msra.mxu0 %v160
    %443 = vmatpush.msra.mxu0 %v156
    %444 = vmatpush.msra.mxu0 %v152
    %445 = vmatpush.msra.mxu0 %v148
    %446 = vmatpush.msra.mxu0 %v144
    %447 = vmatpush.msra.mxu0 %v140
    %448 = vmatpush.msra.mxu0 %v136
    %449 = vmatmul.f32.gmra.mxu0 %v334
    %v450 = vpop.f32.mrf.mxu0
    %v451 = vadd.f32 %v345, %v450
    %452 = vmatmul.f32.gmra.mxu0 %v335
    %v453 = vpop.f32.mrf.mxu0
    %v454 = vadd.f32 %v345, %v453
    %455 = vmatmul.f32.gmra.mxu0 %v336
    %v456 = vpop.f32.mrf.mxu0
    %v457 = vadd.f32 %v345, %v456
    %458 = vmatmul.f32.gmra.mxu0 %v337
    %v459 = vpop.f32.mrf.mxu0
    %v460 = vadd.f32 %v345, %v459
    %461 = vmatmul.f32.gmra.mxu0 %v338
    %v462 = vpop.f32.mrf.mxu0
    %v463 = vadd.f32 %v345, %v462
    %464 = vmatmul.f32.gmra.mxu0 %v339
    %v465 = vpop.f32.mrf.mxu0
    %v466 = vadd.f32 %v345, %v465
    %467 = vmatmul.f32.gmra.mxu0 %v340
    %v468 = vpop.f32.mrf.mxu0
    %v469 = vadd.f32 %v345, %v468
    %470 = vmatmul.f32.gmra.mxu0 %v341
    %v471 = vpop.f32.mrf.mxu0
    %v472 = vadd.f32 %v345, %v471
    %473 = vdwg.mxu0
    %474 = vmatpush.msra.mxu0 %v197
    %475 = vmatpush.msra.mxu0 %v193
    %476 = vmatpush.msra.mxu0 %v189
    %477 = vmatpush.msra.mxu0 %v185
    %478 = vmatpush.msra.mxu0 %v181
    %479 = vmatpush.msra.mxu0 %v177
    %480 = vmatpush.msra.mxu0 %v173
    %481 = vmatpush.msra.mxu0 %v169
    %482 = vmatpush.msra.mxu0 %v165
    %483 = vmatpush.msra.mxu0 %v161
    %484 = vmatpush.msra.mxu0 %v157
    %485 = vmatpush.msra.mxu0 %v153
    %486 = vmatpush.msra.mxu0 %v149
    %487 = vmatpush.msra.mxu0 %v145
    %488 = vmatpush.msra.mxu0 %v141
    %489 = vmatpush.msra.mxu0 %v137
    %490 = vmatmul.f32.gmra.mxu0 %v334
    %v491 = vpop.f32.mrf.mxu0
    %v492 = vadd.f32 %v346, %v491
    %493 = vmatmul.f32.gmra.mxu0 %v335
    %v494 = vpop.f32.mrf.mxu0
    %v495 = vadd.f32 %v346, %v494
    %496 = vmatmul.f32.gmra.mxu0 %v336
    %v497 = vpop.f32.mrf.mxu0
    %v498 = vadd.f32 %v346, %v497
    %499 = vmatmul.f32.gmra.mxu0 %v337
    %v500 = vpop.f32.mrf.mxu0
    %v501 = vadd.f32 %v346, %v500
    %502 = vmatmul.f32.gmra.mxu0 %v338
    %v503 = vpop.f32.mrf.mxu0
    %v504 = vadd.f32 %v346, %v503
    %505 = vmatmul.f32.gmra.mxu0 %v339
    %v506 = vpop.f32.mrf.mxu0
    %v507 = vadd.f32 %v346, %v506
    %508 = vmatmul.f32.gmra.mxu0 %v340
    %v509 = vpop.f32.mrf.mxu0
    %v510 = vadd.f32 %v346, %v509
    %511 = vmatmul.f32.gmra.mxu0 %v341
    %v512 = vpop.f32.mrf.mxu0
    %v513 = vadd.f32 %v346, %v512
    %514 = vdwg.mxu0
    %v515 = vpack.c.bf16 %v372, %v369
    %v516 = vpack.c.bf16 %v378, %v375
    %v517 = vpack.c.bf16 %v384, %v381
    %v518 = vpack.c.bf16 %v390, %v387
    %vm519 = vcmask 523264
    %v521 = vsel %vm519, %v127, 0
    %v524 = vsel %vm519, %v128, 0
    %v527 = vsel %vm519, %v129, 0
    %v530 = vsel %vm519, %v130, 0
    %532 = vmatpush.bf16.msra.mxu0 0
    %533 = vmatpush.bf16.msra.mxu0 0
    %534 = vmatpush.bf16.msra.mxu0 0
    %535 = vmatpush.bf16.msra.mxu0 0
    %536 = vmatpush.bf16.msra.mxu0 %v518
    %537 = vmatpush.bf16.msra.mxu0 %v517
    %538 = vmatpush.bf16.msra.mxu0 %v516
    %539 = vmatpush.bf16.msra.mxu0 %v515
    %540 = vmatmul.bf16.gmra.mxu0 %v521
    %v541 = vpop.f32.mrf.mxu0
    %v542 = vadd.f32 0.0, %v541
    %v543 = vpop.f32.mrf.mxu0
    %v544 = vadd.f32 0.0, %v543
    %545 = vmatmul.bf16.gmra.mxu0 %v524
    %v546 = vpop.f32.mrf.mxu0
    %v547 = vadd.f32 0.0, %v546
    %v548 = vpop.f32.mrf.mxu0
    %v549 = vadd.f32 0.0, %v548
    %550 = vmatmul.bf16.gmra.mxu0 %v527
    %v551 = vpop.f32.mrf.mxu0
    %v552 = vadd.f32 0.0, %v551
    %v553 = vpop.f32.mrf.mxu0
    %v554 = vadd.f32 0.0, %v553
    %555 = vmatmul.bf16.gmra.mxu0 %v530
    %v556 = vpop.f32.mrf.mxu0
    %v557 = vadd.f32 0.0, %v556
    %v558 = vpop.f32.mrf.mxu0
    %v559 = vadd.f32 0.0, %v558
    %560 = vdwg.mxu0
    %v562 = vperm.slane %v247, 0
    %v563 = vperm.slane %v247, 1
    %v564 = vperm.slane %v247, 2
    %568 = vmatpush.msra.mxu0 %v244
    %569 = vmatpush.msra.mxu0 %v241
    %570 = vmatpush.msra.mxu0 %v238
    %571 = vmatpush.msra.mxu0 %v235
    %572 = vmatpush.msra.mxu0 %v232
    %573 = vmatpush.msra.mxu0 %v229
    %574 = vmatpush.msra.mxu0 %v226
    %575 = vmatpush.msra.mxu0 %v223
    %576 = vmatpush.msra.mxu0 %v220
    %577 = vmatpush.msra.mxu0 %v217
    %578 = vmatpush.msra.mxu0 %v214
    %579 = vmatpush.msra.mxu0 %v211
    %580 = vmatpush.msra.mxu0 %v208
    %581 = vmatpush.msra.mxu0 %v205
    %582 = vmatpush.msra.mxu0 %v202
    %583 = vmatpush.msra.mxu0 %v199
    %584 = vmatmul.f32.gmra.mxu0 %v542
    %v585 = vpop.f32.mrf.mxu0
    %v586 = vadd.f32 %v562, %v585
    %587 = vmatmul.f32.gmra.mxu0 %v544
    %v588 = vpop.f32.mrf.mxu0
    %v589 = vadd.f32 %v562, %v588
    %590 = vmatmul.f32.gmra.mxu0 %v547
    %v591 = vpop.f32.mrf.mxu0
    %v592 = vadd.f32 %v562, %v591
    %593 = vmatmul.f32.gmra.mxu0 %v549
    %v594 = vpop.f32.mrf.mxu0
    %v595 = vadd.f32 %v562, %v594
    %596 = vmatmul.f32.gmra.mxu0 %v552
    %v597 = vpop.f32.mrf.mxu0
    %v598 = vadd.f32 %v562, %v597
    %599 = vmatmul.f32.gmra.mxu0 %v554
    %v600 = vpop.f32.mrf.mxu0
    %v601 = vadd.f32 %v562, %v600
    %602 = vmatmul.f32.gmra.mxu0 %v557
    %v603 = vpop.f32.mrf.mxu0
    %v604 = vadd.f32 %v562, %v603
    %605 = vmatmul.f32.gmra.mxu0 %v559
    %v606 = vpop.f32.mrf.mxu0
    %v607 = vadd.f32 %v562, %v606
    %608 = vdwg.mxu0
    %609 = vmatpush.msra.mxu0 %v245
    %610 = vmatpush.msra.mxu0 %v242
    %611 = vmatpush.msra.mxu0 %v239
    %612 = vmatpush.msra.mxu0 %v236
    %613 = vmatpush.msra.mxu0 %v233
    %614 = vmatpush.msra.mxu0 %v230
    %615 = vmatpush.msra.mxu0 %v227
    %616 = vmatpush.msra.mxu0 %v224
    %617 = vmatpush.msra.mxu0 %v221
    %618 = vmatpush.msra.mxu0 %v218
    %619 = vmatpush.msra.mxu0 %v215
    %620 = vmatpush.msra.mxu0 %v212
    %621 = vmatpush.msra.mxu0 %v209
    %622 = vmatpush.msra.mxu0 %v206
    %623 = vmatpush.msra.mxu0 %v203
    %624 = vmatpush.msra.mxu0 %v200
    %625 = vmatmul.f32.gmra.mxu0 %v542
    %v626 = vpop.f32.mrf.mxu0
    %v627 = vadd.f32 %v563, %v626
    %628 = vmatmul.f32.gmra.mxu0 %v544
    %v629 = vpop.f32.mrf.mxu0
    %v630 = vadd.f32 %v563, %v629
    %631 = vmatmul.f32.gmra.mxu0 %v547
    %v632 = vpop.f32.mrf.mxu0
    %v633 = vadd.f32 %v563, %v632
    %634 = vmatmul.f32.gmra.mxu0 %v549
    %v635 = vpop.f32.mrf.mxu0
    %v636 = vadd.f32 %v563, %v635
    %637 = vmatmul.f32.gmra.mxu0 %v552
    %v638 = vpop.f32.mrf.mxu0
    %v639 = vadd.f32 %v563, %v638
    %640 = vmatmul.f32.gmra.mxu0 %v554
    %v641 = vpop.f32.mrf.mxu0
    %v642 = vadd.f32 %v563, %v641
    %643 = vmatmul.f32.gmra.mxu0 %v557
    %v644 = vpop.f32.mrf.mxu0
    %v645 = vadd.f32 %v563, %v644
    %646 = vmatmul.f32.gmra.mxu0 %v559
    %v647 = vpop.f32.mrf.mxu0
    %v648 = vadd.f32 %v563, %v647
    %649 = vdwg.mxu0
    %650 = vmatpush.msra.mxu0 %v246
    %651 = vmatpush.msra.mxu0 %v243
    %652 = vmatpush.msra.mxu0 %v240
    %653 = vmatpush.msra.mxu0 %v237
    %654 = vmatpush.msra.mxu0 %v234
    %655 = vmatpush.msra.mxu0 %v231
    %656 = vmatpush.msra.mxu0 %v228
    %657 = vmatpush.msra.mxu0 %v225
    %658 = vmatpush.msra.mxu0 %v222
    %659 = vmatpush.msra.mxu0 %v219
    %660 = vmatpush.msra.mxu0 %v216
    %661 = vmatpush.msra.mxu0 %v213
    %662 = vmatpush.msra.mxu0 %v210
    %663 = vmatpush.msra.mxu0 %v207
    %664 = vmatpush.msra.mxu0 %v204
    %665 = vmatpush.msra.mxu0 %v201
    %666 = vmatmul.f32.gmra.mxu0 %v542
    %v667 = vpop.f32.mrf.mxu0
    %v668 = vadd.f32 %v564, %v667
    %669 = vmatmul.f32.gmra.mxu0 %v544
    %v670 = vpop.f32.mrf.mxu0
    %v671 = vadd.f32 %v564, %v670
    %672 = vmatmul.f32.gmra.mxu0 %v547
    %v673 = vpop.f32.mrf.mxu0
    %v674 = vadd.f32 %v564, %v673
    %675 = vmatmul.f32.gmra.mxu0 %v549
    %v676 = vpop.f32.mrf.mxu0
    %v677 = vadd.f32 %v564, %v676
    %678 = vmatmul.f32.gmra.mxu0 %v552
    %v679 = vpop.f32.mrf.mxu0
    %v680 = vadd.f32 %v564, %v679
    %681 = vmatmul.f32.gmra.mxu0 %v554
    %v682 = vpop.f32.mrf.mxu0
    %v683 = vadd.f32 %v564, %v682
    %684 = vmatmul.f32.gmra.mxu0 %v557
    %v685 = vpop.f32.mrf.mxu0
    %v686 = vadd.f32 %v564, %v685
    %687 = vmatmul.f32.gmra.mxu0 %v559
    %v688 = vpop.f32.mrf.mxu0
    %v689 = vadd.f32 %v564, %v688
    %690 = vdwg.mxu0
    %v691 = vadd.f32 %v586, %v410
    %v692 = vadd.f32 %v589, %v413
    %v693 = vadd.f32 %v592, %v416
    %v694 = vadd.f32 %v595, %v419
    %v695 = vadd.f32 %v598, %v422
    %v696 = vadd.f32 %v601, %v425
    %v697 = vadd.f32 %v604, %v428
    %v698 = vadd.f32 %v607, %v431
    %v699 = vxor.u32 %v691, 2147483648
    %v700 = vxor.u32 %v692, 2147483648
    %v701 = vxor.u32 %v693, 2147483648
    %v702 = vxor.u32 %v694, 2147483648
    %v703 = vxor.u32 %v695, 2147483648
    %v704 = vxor.u32 %v696, 2147483648
    %v705 = vxor.u32 %v697, 2147483648
    %v706 = vxor.u32 %v698, 2147483648
    %v707 = vmul.f32 %v699, 1.442695
    %v708 = vpow.pop %v707
    %v709 = vmul.f32 %v700, 1.442695
    %v710 = vpow.pop %v709
    %v711 = vmul.f32 %v701, 1.442695
    %v712 = vpow.pop %v711
    %v713 = vmul.f32 %v702, 1.442695
    %v714 = vpow.pop %v713
    %v715 = vmul.f32 %v703, 1.442695
    %v716 = vpow.pop %v715
    %v717 = vmul.f32 %v704, 1.442695
    %v718 = vpow.pop %v717
    %v719 = vmul.f32 %v705, 1.442695
    %v720 = vpow.pop %v719
    %v721 = vmul.f32 %v706, 1.442695
    %v722 = vpow.pop %v721
    %v723 = vadd.f32 %v708, 1.0
    %v724 = vadd.f32 %v710, 1.0
    %v725 = vadd.f32 %v712, 1.0
    %v726 = vadd.f32 %v714, 1.0
    %v727 = vadd.f32 %v716, 1.0
    %v728 = vadd.f32 %v718, 1.0
    %v729 = vadd.f32 %v720, 1.0
    %v730 = vadd.f32 %v722, 1.0
    %v731 = vrcp.pop %v723
    %v732 = vmul.f32 %v723, %v731
    %v733 = vsub.f32 1.0, %v732
    %v734 = vmul.f32 %v731, %v733
    %v735 = vadd.f32 %v731, %v734
    %vm736 = vweird.f32 %v723
    %vm737 = vweird.f32 %v731
    %vm738 = vmor %vm736, %vm737
    %v739 = vsel %vm738, %v731, %v735
    %v740 = vand.u32 2147483647, %v723
    %vm741 = vcmp.eq.f32.partialorder %v740, 8.507059e+37
    %v742 = vand.u32 %v723, 2147483648
    %v743 = vor.u32 1.1754944e-38, %v742
    %v744 = vsel %vm741, %v743, %v739
    %v745 = vmul.f32 1.0, %v744
    %v746 = vrcp.pop %v724
    %v747 = vmul.f32 %v724, %v746
    %v748 = vsub.f32 1.0, %v747
    %v749 = vmul.f32 %v746, %v748
    %v750 = vadd.f32 %v746, %v749
    %vm751 = vweird.f32 %v724
    %vm752 = vweird.f32 %v746
    %vm753 = vmor %vm751, %vm752
    %v754 = vsel %vm753, %v746, %v750
    %v755 = vand.u32 2147483647, %v724
    %vm756 = vcmp.eq.f32.partialorder %v755, 8.507059e+37
    %v757 = vand.u32 %v724, 2147483648
    %v758 = vor.u32 1.1754944e-38, %v757
    %v759 = vsel %vm756, %v758, %v754
    %v760 = vmul.f32 1.0, %v759
    %v761 = vrcp.pop %v725
    %v762 = vmul.f32 %v725, %v761
    %v763 = vsub.f32 1.0, %v762
    %v764 = vmul.f32 %v761, %v763
    %v765 = vadd.f32 %v761, %v764
    %vm766 = vweird.f32 %v725
    %vm767 = vweird.f32 %v761
    %vm768 = vmor %vm766, %vm767
    %v769 = vsel %vm768, %v761, %v765
    %v770 = vand.u32 2147483647, %v725
    %vm771 = vcmp.eq.f32.partialorder %v770, 8.507059e+37
    %v772 = vand.u32 %v725, 2147483648
    %v773 = vor.u32 1.1754944e-38, %v772
    %v774 = vsel %vm771, %v773, %v769
    %v775 = vmul.f32 1.0, %v774
    %v776 = vrcp.pop %v726
    %v777 = vmul.f32 %v726, %v776
    %v778 = vsub.f32 1.0, %v777
    %v779 = vmul.f32 %v776, %v778
    %v780 = vadd.f32 %v776, %v779
    %vm781 = vweird.f32 %v726
    %vm782 = vweird.f32 %v776
    %vm783 = vmor %vm781, %vm782
    %v784 = vsel %vm783, %v776, %v780
    %v785 = vand.u32 2147483647, %v726
    %vm786 = vcmp.eq.f32.partialorder %v785, 8.507059e+37
    %v787 = vand.u32 %v726, 2147483648
    %v788 = vor.u32 1.1754944e-38, %v787
    %v789 = vsel %vm786, %v788, %v784
    %v790 = vmul.f32 1.0, %v789
    %v791 = vrcp.pop %v727
    %v792 = vmul.f32 %v727, %v791
    %v793 = vsub.f32 1.0, %v792
    %v794 = vmul.f32 %v791, %v793
    %v795 = vadd.f32 %v791, %v794
    %vm796 = vweird.f32 %v727
    %vm797 = vweird.f32 %v791
    %vm798 = vmor %vm796, %vm797
    %v799 = vsel %vm798, %v791, %v795
    %v800 = vand.u32 2147483647, %v727
    %vm801 = vcmp.eq.f32.partialorder %v800, 8.507059e+37
    %v802 = vand.u32 %v727, 2147483648
    %v803 = vor.u32 1.1754944e-38, %v802
    %v804 = vsel %vm801, %v803, %v799
    %v805 = vmul.f32 1.0, %v804
    %v806 = vrcp.pop %v728
    %v807 = vmul.f32 %v728, %v806
    %v808 = vsub.f32 1.0, %v807
    %v809 = vmul.f32 %v806, %v808
    %v810 = vadd.f32 %v806, %v809
    %vm811 = vweird.f32 %v728
    %vm812 = vweird.f32 %v806
    %vm813 = vmor %vm811, %vm812
    %v814 = vsel %vm813, %v806, %v810
    %v815 = vand.u32 2147483647, %v728
    %vm816 = vcmp.eq.f32.partialorder %v815, 8.507059e+37
    %v817 = vand.u32 %v728, 2147483648
    %v818 = vor.u32 1.1754944e-38, %v817
    %v819 = vsel %vm816, %v818, %v814
    %v820 = vmul.f32 1.0, %v819
    %v821 = vrcp.pop %v729
    %v822 = vmul.f32 %v729, %v821
    %v823 = vsub.f32 1.0, %v822
    %v824 = vmul.f32 %v821, %v823
    %v825 = vadd.f32 %v821, %v824
    %vm826 = vweird.f32 %v729
    %vm827 = vweird.f32 %v821
    %vm828 = vmor %vm826, %vm827
    %v829 = vsel %vm828, %v821, %v825
    %v830 = vand.u32 2147483647, %v729
    %vm831 = vcmp.eq.f32.partialorder %v830, 8.507059e+37
    %v832 = vand.u32 %v729, 2147483648
    %v833 = vor.u32 1.1754944e-38, %v832
    %v834 = vsel %vm831, %v833, %v829
    %v835 = vmul.f32 1.0, %v834
    %v836 = vrcp.pop %v730
    %v837 = vmul.f32 %v730, %v836
    %v838 = vsub.f32 1.0, %v837
    %v839 = vmul.f32 %v836, %v838
    %v840 = vadd.f32 %v836, %v839
    %vm841 = vweird.f32 %v730
    %vm842 = vweird.f32 %v836
    %vm843 = vmor %vm841, %vm842
    %v844 = vsel %vm843, %v836, %v840
    %v845 = vand.u32 2147483647, %v730
    %vm846 = vcmp.eq.f32.partialorder %v845, 8.507059e+37
    %v847 = vand.u32 %v730, 2147483648
    %v848 = vor.u32 1.1754944e-38, %v847
    %v849 = vsel %vm846, %v848, %v844
    %v850 = vmul.f32 1.0, %v849
    %v851 = vadd.f32 %v627, %v451
    %v852 = vadd.f32 %v630, %v454
    %v853 = vadd.f32 %v633, %v457
    %v854 = vadd.f32 %v636, %v460
    %v855 = vadd.f32 %v639, %v463
    %v856 = vadd.f32 %v642, %v466
    %v857 = vadd.f32 %v645, %v469
    %v858 = vadd.f32 %v648, %v472
    %v859 = vxor.u32 %v851, 2147483648
    %v860 = vxor.u32 %v852, 2147483648
    %v861 = vxor.u32 %v853, 2147483648
    %v862 = vxor.u32 %v854, 2147483648
    %v863 = vxor.u32 %v855, 2147483648
    %v864 = vxor.u32 %v856, 2147483648
    %v865 = vxor.u32 %v857, 2147483648
    %v866 = vxor.u32 %v858, 2147483648
    %v867 = vmul.f32 %v859, 1.442695
    %v868 = vpow.pop %v867
    %v869 = vmul.f32 %v860, 1.442695
    %v870 = vpow.pop %v869
    %v871 = vmul.f32 %v861, 1.442695
    %v872 = vpow.pop %v871
    %v873 = vmul.f32 %v862, 1.442695
    %v874 = vpow.pop %v873
    %v875 = vmul.f32 %v863, 1.442695
    %v876 = vpow.pop %v875
    %v877 = vmul.f32 %v864, 1.442695
    %v878 = vpow.pop %v877
    %v879 = vmul.f32 %v865, 1.442695
    %v880 = vpow.pop %v879
    %v881 = vmul.f32 %v866, 1.442695
    %v882 = vpow.pop %v881
    %v883 = vadd.f32 %v868, 1.0
    %v884 = vadd.f32 %v870, 1.0
    %v885 = vadd.f32 %v872, 1.0
    %v886 = vadd.f32 %v874, 1.0
    %v887 = vadd.f32 %v876, 1.0
    %v888 = vadd.f32 %v878, 1.0
    %v889 = vadd.f32 %v880, 1.0
    %v890 = vadd.f32 %v882, 1.0
    %v891 = vrcp.pop %v883
    %v892 = vmul.f32 %v883, %v891
    %v893 = vsub.f32 1.0, %v892
    %v894 = vmul.f32 %v891, %v893
    %v895 = vadd.f32 %v891, %v894
    %vm896 = vweird.f32 %v883
    %vm897 = vweird.f32 %v891
    %vm898 = vmor %vm896, %vm897
    %v899 = vsel %vm898, %v891, %v895
    %v900 = vand.u32 2147483647, %v883
    %vm901 = vcmp.eq.f32.partialorder %v900, 8.507059e+37
    %v902 = vand.u32 %v883, 2147483648
    %v903 = vor.u32 1.1754944e-38, %v902
    %v904 = vsel %vm901, %v903, %v899
    %v905 = vmul.f32 1.0, %v904
    %v906 = vrcp.pop %v884
    %v907 = vmul.f32 %v884, %v906
    %v908 = vsub.f32 1.0, %v907
    %v909 = vmul.f32 %v906, %v908
    %v910 = vadd.f32 %v906, %v909
    %vm911 = vweird.f32 %v884
    %vm912 = vweird.f32 %v906
    %vm913 = vmor %vm911, %vm912
    %v914 = vsel %vm913, %v906, %v910
    %v915 = vand.u32 2147483647, %v884
    %vm916 = vcmp.eq.f32.partialorder %v915, 8.507059e+37
    %v917 = vand.u32 %v884, 2147483648
    %v918 = vor.u32 1.1754944e-38, %v917
    %v919 = vsel %vm916, %v918, %v914
    %v920 = vmul.f32 1.0, %v919
    %v921 = vrcp.pop %v885
    %v922 = vmul.f32 %v885, %v921
    %v923 = vsub.f32 1.0, %v922
    %v924 = vmul.f32 %v921, %v923
    %v925 = vadd.f32 %v921, %v924
    %vm926 = vweird.f32 %v885
    %vm927 = vweird.f32 %v921
    %vm928 = vmor %vm926, %vm927
    %v929 = vsel %vm928, %v921, %v925
    %v930 = vand.u32 2147483647, %v885
    %vm931 = vcmp.eq.f32.partialorder %v930, 8.507059e+37
    %v932 = vand.u32 %v885, 2147483648
    %v933 = vor.u32 1.1754944e-38, %v932
    %v934 = vsel %vm931, %v933, %v929
    %v935 = vmul.f32 1.0, %v934
    %v936 = vrcp.pop %v886
    %v937 = vmul.f32 %v886, %v936
    %v938 = vsub.f32 1.0, %v937
    %v939 = vmul.f32 %v936, %v938
    %v940 = vadd.f32 %v936, %v939
    %vm941 = vweird.f32 %v886
    %vm942 = vweird.f32 %v936
    %vm943 = vmor %vm941, %vm942
    %v944 = vsel %vm943, %v936, %v940
    %v945 = vand.u32 2147483647, %v886
    %vm946 = vcmp.eq.f32.partialorder %v945, 8.507059e+37
    %v947 = vand.u32 %v886, 2147483648
    %v948 = vor.u32 1.1754944e-38, %v947
    %v949 = vsel %vm946, %v948, %v944
    %v950 = vmul.f32 1.0, %v949
    %v951 = vrcp.pop %v887
    %v952 = vmul.f32 %v887, %v951
    %v953 = vsub.f32 1.0, %v952
    %v954 = vmul.f32 %v951, %v953
    %v955 = vadd.f32 %v951, %v954
    %vm956 = vweird.f32 %v887
    %vm957 = vweird.f32 %v951
    %vm958 = vmor %vm956, %vm957
    %v959 = vsel %vm958, %v951, %v955
    %v960 = vand.u32 2147483647, %v887
    %vm961 = vcmp.eq.f32.partialorder %v960, 8.507059e+37
    %v962 = vand.u32 %v887, 2147483648
    %v963 = vor.u32 1.1754944e-38, %v962
    %v964 = vsel %vm961, %v963, %v959
    %v965 = vmul.f32 1.0, %v964
    %v966 = vrcp.pop %v888
    %v967 = vmul.f32 %v888, %v966
    %v968 = vsub.f32 1.0, %v967
    %v969 = vmul.f32 %v966, %v968
    %v970 = vadd.f32 %v966, %v969
    %vm971 = vweird.f32 %v888
    %vm972 = vweird.f32 %v966
    %vm973 = vmor %vm971, %vm972
    %v974 = vsel %vm973, %v966, %v970
    %v975 = vand.u32 2147483647, %v888
    %vm976 = vcmp.eq.f32.partialorder %v975, 8.507059e+37
    %v977 = vand.u32 %v888, 2147483648
    %v978 = vor.u32 1.1754944e-38, %v977
    %v979 = vsel %vm976, %v978, %v974
    %v980 = vmul.f32 1.0, %v979
    %v981 = vrcp.pop %v889
    %v982 = vmul.f32 %v889, %v981
    %v983 = vsub.f32 1.0, %v982
    %v984 = vmul.f32 %v981, %v983
    %v985 = vadd.f32 %v981, %v984
    %vm986 = vweird.f32 %v889
    %vm987 = vweird.f32 %v981
    %vm988 = vmor %vm986, %vm987
    %v989 = vsel %vm988, %v981, %v985
    %v990 = vand.u32 2147483647, %v889
    %vm991 = vcmp.eq.f32.partialorder %v990, 8.507059e+37
    %v992 = vand.u32 %v889, 2147483648
    %v993 = vor.u32 1.1754944e-38, %v992
    %v994 = vsel %vm991, %v993, %v989
    %v995 = vmul.f32 1.0, %v994
    %v996 = vrcp.pop %v890
    %v997 = vmul.f32 %v890, %v996
    %v998 = vsub.f32 1.0, %v997
    %v999 = vmul.f32 %v996, %v998
    %v1000 = vadd.f32 %v996, %v999
    %vm1001 = vweird.f32 %v890
    %vm1002 = vweird.f32 %v996
    %vm1003 = vmor %vm1001, %vm1002
    %v1004 = vsel %vm1003, %v996, %v1000
    %v1005 = vand.u32 2147483647, %v890
    %vm1006 = vcmp.eq.f32.partialorder %v1005, 8.507059e+37
    %v1007 = vand.u32 %v890, 2147483648
    %v1008 = vor.u32 1.1754944e-38, %v1007
    %v1009 = vsel %vm1006, %v1008, %v1004
    %v1010 = vmul.f32 1.0, %v1009
    %v1011 = vmul.f32 %v745, %v492
    %v1012 = vmul.f32 %v760, %v495
    %v1013 = vmul.f32 %v775, %v498
    %v1014 = vmul.f32 %v790, %v501
    %v1015 = vmul.f32 %v805, %v504
    %v1016 = vmul.f32 %v820, %v507
    %v1017 = vmul.f32 %v835, %v510
    %v1018 = vmul.f32 %v850, %v513
    %v1019 = vadd.f32 %v668, %v1011
    %v1020 = vadd.f32 %v671, %v1012
    %v1021 = vadd.f32 %v674, %v1013
    %v1022 = vadd.f32 %v677, %v1014
    %v1023 = vadd.f32 %v680, %v1015
    %v1024 = vadd.f32 %v683, %v1016
    %v1025 = vadd.f32 %v686, %v1017
    %v1026 = vadd.f32 %v689, %v1018
    %v1027 = vtanh.pop %v1019
    %v1028 = vtanh.pop %v1020
    %v1029 = vtanh.pop %v1021
    %v1030 = vtanh.pop %v1022
    %v1031 = vtanh.pop %v1023
    %v1032 = vtanh.pop %v1024
    %v1033 = vtanh.pop %v1025
    %v1034 = vtanh.pop %v1026
    %v1035 = vsub.f32 1.0, %v905
    %v1036 = vsub.f32 1.0, %v920
    %v1037 = vsub.f32 1.0, %v935
    %v1038 = vsub.f32 1.0, %v950
    %v1039 = vsub.f32 1.0, %v965
    %v1040 = vsub.f32 1.0, %v980
    %v1041 = vsub.f32 1.0, %v995
    %v1042 = vsub.f32 1.0, %v1010
    %v1043 = vmul.f32 %v1035, %v1027
    %v1044 = vmul.f32 %v1036, %v1028
    %v1045 = vmul.f32 %v1037, %v1029
    %v1046 = vmul.f32 %v1038, %v1030
    %v1047 = vmul.f32 %v1039, %v1031
    %v1048 = vmul.f32 %v1040, %v1032
    %v1049 = vmul.f32 %v1041, %v1033
    %v1050 = vmul.f32 %v1042, %v1034
    %v1051 = vmul.f32 %v905, %v334
    %v1052 = vmul.f32 %v920, %v335
    %v1053 = vmul.f32 %v935, %v336
    %v1054 = vmul.f32 %v950, %v337
    %v1055 = vmul.f32 %v965, %v338
    %v1056 = vmul.f32 %v980, %v339
    %v1057 = vmul.f32 %v995, %v340
    %v1058 = vmul.f32 %v1010, %v341
    %v1059 = vadd.f32 %v1043, %v1051
    %v1060 = vadd.f32 %v1044, %v1052
    %v1061 = vadd.f32 %v1045, %v1053
    %v1062 = vadd.f32 %v1046, %v1054
    %v1063 = vadd.f32 %v1047, %v1055
    %v1064 = vadd.f32 %v1048, %v1056
    %v1065 = vadd.f32 %v1049, %v1057
    %v1066 = vadd.f32 %v1050, %v1058
    %1067 = vmatpush.msra.mxu0 %v194
    %1068 = vmatpush.msra.mxu0 %v190
    %1069 = vmatpush.msra.mxu0 %v186
    %1070 = vmatpush.msra.mxu0 %v182
    %1071 = vmatpush.msra.mxu0 %v178
    %1072 = vmatpush.msra.mxu0 %v174
    %1073 = vmatpush.msra.mxu0 %v170
    %1074 = vmatpush.msra.mxu0 %v166
    %1075 = vmatpush.msra.mxu0 %v162
    %1076 = vmatpush.msra.mxu0 %v158
    %1077 = vmatpush.msra.mxu0 %v154
    %1078 = vmatpush.msra.mxu0 %v150
    %1079 = vmatpush.msra.mxu0 %v146
    %1080 = vmatpush.msra.mxu0 %v142
    %1081 = vmatpush.msra.mxu0 %v138
    %1082 = vmatpush.msra.mxu0 %v134
    %1083 = vmatmul.f32.gmra.mxu0 %v1059
    %v1084 = vpop.f32.mrf.mxu0
    %v1085 = vadd.f32 %v343, %v1084
    %1086 = vmatmul.f32.gmra.mxu0 %v1060
    %v1087 = vpop.f32.mrf.mxu0
    %v1088 = vadd.f32 %v343, %v1087
    %1089 = vmatmul.f32.gmra.mxu0 %v1061
    %v1090 = vpop.f32.mrf.mxu0
    %v1091 = vadd.f32 %v343, %v1090
    %1092 = vmatmul.f32.gmra.mxu0 %v1062
    %v1093 = vpop.f32.mrf.mxu0
    %v1094 = vadd.f32 %v343, %v1093
    %1095 = vmatmul.f32.gmra.mxu0 %v1063
    %v1096 = vpop.f32.mrf.mxu0
    %v1097 = vadd.f32 %v343, %v1096
    %1098 = vmatmul.f32.gmra.mxu0 %v1064
    %v1099 = vpop.f32.mrf.mxu0
    %v1100 = vadd.f32 %v343, %v1099
    %1101 = vmatmul.f32.gmra.mxu0 %v1065
    %v1102 = vpop.f32.mrf.mxu0
    %v1103 = vadd.f32 %v343, %v1102
    %1104 = vmatmul.f32.gmra.mxu0 %v1066
    %v1105 = vpop.f32.mrf.mxu0
    %v1106 = vadd.f32 %v343, %v1105
    %1107 = vdwg.mxu0
    %1108 = vmatpush.msra.mxu0 %v195
    %1109 = vmatpush.msra.mxu0 %v191
    %1110 = vmatpush.msra.mxu0 %v187
    %1111 = vmatpush.msra.mxu0 %v183
    %1112 = vmatpush.msra.mxu0 %v179
    %1113 = vmatpush.msra.mxu0 %v175
    %1114 = vmatpush.msra.mxu0 %v171
    %1115 = vmatpush.msra.mxu0 %v167
    %1116 = vmatpush.msra.mxu0 %v163
    %1117 = vmatpush.msra.mxu0 %v159
    %1118 = vmatpush.msra.mxu0 %v155
    %1119 = vmatpush.msra.mxu0 %v151
    %1120 = vmatpush.msra.mxu0 %v147
    %1121 = vmatpush.msra.mxu0 %v143
    %1122 = vmatpush.msra.mxu0 %v139
    %1123 = vmatpush.msra.mxu0 %v135
    %1124 = vmatmul.f32.gmra.mxu0 %v1059
    %v1125 = vpop.f32.mrf.mxu0
    %v1126 = vadd.f32 %v344, %v1125
    %1127 = vmatmul.f32.gmra.mxu0 %v1060
    %v1128 = vpop.f32.mrf.mxu0
    %v1129 = vadd.f32 %v344, %v1128
    %1130 = vmatmul.f32.gmra.mxu0 %v1061
    %v1131 = vpop.f32.mrf.mxu0
    %v1132 = vadd.f32 %v344, %v1131
    %1133 = vmatmul.f32.gmra.mxu0 %v1062
    %v1134 = vpop.f32.mrf.mxu0
    %v1135 = vadd.f32 %v344, %v1134
    %1136 = vmatmul.f32.gmra.mxu0 %v1063
    %v1137 = vpop.f32.mrf.mxu0
    %v1138 = vadd.f32 %v344, %v1137
    %1139 = vmatmul.f32.gmra.mxu0 %v1064
    %v1140 = vpop.f32.mrf.mxu0
    %v1141 = vadd.f32 %v344, %v1140
    %1142 = vmatmul.f32.gmra.mxu0 %v1065
    %v1143 = vpop.f32.mrf.mxu0
    %v1144 = vadd.f32 %v344, %v1143
    %1145 = vmatmul.f32.gmra.mxu0 %v1066
    %v1146 = vpop.f32.mrf.mxu0
    %v1147 = vadd.f32 %v344, %v1146
    %1148 = vdwg.mxu0
    %1149 = vmatpush.msra.mxu0 %v196
    %1150 = vmatpush.msra.mxu0 %v192
    %1151 = vmatpush.msra.mxu0 %v188
    %1152 = vmatpush.msra.mxu0 %v184
    %1153 = vmatpush.msra.mxu0 %v180
    %1154 = vmatpush.msra.mxu0 %v176
    %1155 = vmatpush.msra.mxu0 %v172
    %1156 = vmatpush.msra.mxu0 %v168
    %1157 = vmatpush.msra.mxu0 %v164
    %1158 = vmatpush.msra.mxu0 %v160
    %1159 = vmatpush.msra.mxu0 %v156
    %1160 = vmatpush.msra.mxu0 %v152
    %1161 = vmatpush.msra.mxu0 %v148
    %1162 = vmatpush.msra.mxu0 %v144
    %1163 = vmatpush.msra.mxu0 %v140
    %1164 = vmatpush.msra.mxu0 %v136
    %1165 = vmatmul.f32.gmra.mxu0 %v1059
    %v1166 = vpop.f32.mrf.mxu0
    %v1167 = vadd.f32 %v345, %v1166
    %1168 = vmatmul.f32.gmra.mxu0 %v1060
    %v1169 = vpop.f32.mrf.mxu0
    %v1170 = vadd.f32 %v345, %v1169
    %1171 = vmatmul.f32.gmra.mxu0 %v1061
    %v1172 = vpop.f32.mrf.mxu0
    %v1173 = vadd.f32 %v345, %v1172
    %1174 = vmatmul.f32.gmra.mxu0 %v1062
    %v1175 = vpop.f32.mrf.mxu0
    %v1176 = vadd.f32 %v345, %v1175
    %1177 = vmatmul.f32.gmra.mxu0 %v1063
    %v1178 = vpop.f32.mrf.mxu0
    %v1179 = vadd.f32 %v345, %v1178
    %1180 = vmatmul.f32.gmra.mxu0 %v1064
    %v1181 = vpop.f32.mrf.mxu0
    %v1182 = vadd.f32 %v345, %v1181
    %1183 = vmatmul.f32.gmra.mxu0 %v1065
    %v1184 = vpop.f32.mrf.mxu0
    %v1185 = vadd.f32 %v345, %v1184
    %1186 = vmatmul.f32.gmra.mxu0 %v1066
    %v1187 = vpop.f32.mrf.mxu0
    %v1188 = vadd.f32 %v345, %v1187
    %1189 = vdwg.mxu0
    %1190 = vmatpush.msra.mxu0 %v197
    %1191 = vmatpush.msra.mxu0 %v193
    %1192 = vmatpush.msra.mxu0 %v189
    %1193 = vmatpush.msra.mxu0 %v185
    %1194 = vmatpush.msra.mxu0 %v181
    %1195 = vmatpush.msra.mxu0 %v177
    %1196 = vmatpush.msra.mxu0 %v173
    %1197 = vmatpush.msra.mxu0 %v169
    %1198 = vmatpush.msra.mxu0 %v165
    %1199 = vmatpush.msra.mxu0 %v161
    %1200 = vmatpush.msra.mxu0 %v157
    %1201 = vmatpush.msra.mxu0 %v153
    %1202 = vmatpush.msra.mxu0 %v149
    %1203 = vmatpush.msra.mxu0 %v145
    %1204 = vmatpush.msra.mxu0 %v141
    %1205 = vmatpush.msra.mxu0 %v137
    %1206 = vmatmul.f32.gmra.mxu0 %v1059
    %v1207 = vpop.f32.mrf.mxu0
    %v1208 = vadd.f32 %v346, %v1207
    %1209 = vmatmul.f32.gmra.mxu0 %v1060
    %v1210 = vpop.f32.mrf.mxu0
    %v1211 = vadd.f32 %v346, %v1210
    %1212 = vmatmul.f32.gmra.mxu0 %v1061
    %v1213 = vpop.f32.mrf.mxu0
    %v1214 = vadd.f32 %v346, %v1213
    %1215 = vmatmul.f32.gmra.mxu0 %v1062
    %v1216 = vpop.f32.mrf.mxu0
    %v1217 = vadd.f32 %v346, %v1216
    %1218 = vmatmul.f32.gmra.mxu0 %v1063
    %v1219 = vpop.f32.mrf.mxu0
    %v1220 = vadd.f32 %v346, %v1219
    %1221 = vmatmul.f32.gmra.mxu0 %v1064
    %v1222 = vpop.f32.mrf.mxu0
    %v1223 = vadd.f32 %v346, %v1222
    %1224 = vmatmul.f32.gmra.mxu0 %v1065
    %v1225 = vpop.f32.mrf.mxu0
    %v1226 = vadd.f32 %v346, %v1225
    %1227 = vmatmul.f32.gmra.mxu0 %v1066
    %v1228 = vpop.f32.mrf.mxu0
    %v1229 = vadd.f32 %v346, %v1228
    %1230 = vdwg.mxu0
    %v1231 = vpack.c.bf16 %v1088, %v1085
    %v1232 = vpack.c.bf16 %v1094, %v1091
    %v1233 = vpack.c.bf16 %v1100, %v1097
    %v1234 = vpack.c.bf16 %v1106, %v1103
    %1235 = vmatpush.bf16.msra.mxu0 0
    %1236 = vmatpush.bf16.msra.mxu0 0
    %1237 = vmatpush.bf16.msra.mxu0 0
    %1238 = vmatpush.bf16.msra.mxu0 0
    %1239 = vmatpush.bf16.msra.mxu0 %v1234
    %1240 = vmatpush.bf16.msra.mxu0 %v1233
    %1241 = vmatpush.bf16.msra.mxu0 %v1232
    %1242 = vmatpush.bf16.msra.mxu0 %v1231
    %1243 = vmatmul.bf16.gmra.mxu0 %v521
    %v1244 = vpop.f32.mrf.mxu0
    %v1245 = vadd.f32 0.0, %v1244
    %v1246 = vpop.f32.mrf.mxu0
    %v1247 = vadd.f32 0.0, %v1246
    %1248 = vmatmul.bf16.gmra.mxu0 %v524
    %v1249 = vpop.f32.mrf.mxu0
    %v1250 = vadd.f32 0.0, %v1249
    %v1251 = vpop.f32.mrf.mxu0
    %v1252 = vadd.f32 0.0, %v1251
    %1253 = vmatmul.bf16.gmra.mxu0 %v527
    %v1254 = vpop.f32.mrf.mxu0
    %v1255 = vadd.f32 0.0, %v1254
    %v1256 = vpop.f32.mrf.mxu0
    %v1257 = vadd.f32 0.0, %v1256
    %1258 = vmatmul.bf16.gmra.mxu0 %v530
    %v1259 = vpop.f32.mrf.mxu0
    %v1260 = vadd.f32 0.0, %v1259
    %v1261 = vpop.f32.mrf.mxu0
    %v1262 = vadd.f32 0.0, %v1261
    %1263 = vdwg.mxu0
    %1264 = vmatpush.msra.mxu0 %v244
    %1265 = vmatpush.msra.mxu0 %v241
    %1266 = vmatpush.msra.mxu0 %v238
    %1267 = vmatpush.msra.mxu0 %v235
    %1268 = vmatpush.msra.mxu0 %v232
    %1269 = vmatpush.msra.mxu0 %v229
    %1270 = vmatpush.msra.mxu0 %v226
    %1271 = vmatpush.msra.mxu0 %v223
    %1272 = vmatpush.msra.mxu0 %v220
    %1273 = vmatpush.msra.mxu0 %v217
    %1274 = vmatpush.msra.mxu0 %v214
    %1275 = vmatpush.msra.mxu0 %v211
    %1276 = vmatpush.msra.mxu0 %v208
    %1277 = vmatpush.msra.mxu0 %v205
    %1278 = vmatpush.msra.mxu0 %v202
    %1279 = vmatpush.msra.mxu0 %v199
    %1280 = vmatmul.f32.gmra.mxu0 %v1245
    %v1281 = vpop.f32.mrf.mxu0
    %v1282 = vadd.f32 %v562, %v1281
    %1283 = vmatmul.f32.gmra.mxu0 %v1247
    %v1284 = vpop.f32.mrf.mxu0
    %v1285 = vadd.f32 %v562, %v1284
    %1286 = vmatmul.f32.gmra.mxu0 %v1250
    %v1287 = vpop.f32.mrf.mxu0
    %v1288 = vadd.f32 %v562, %v1287
    %1289 = vmatmul.f32.gmra.mxu0 %v1252
    %v1290 = vpop.f32.mrf.mxu0
    %v1291 = vadd.f32 %v562, %v1290
    %1292 = vmatmul.f32.gmra.mxu0 %v1255
    %v1293 = vpop.f32.mrf.mxu0
    %v1294 = vadd.f32 %v562, %v1293
    %1295 = vmatmul.f32.gmra.mxu0 %v1257
    %v1296 = vpop.f32.mrf.mxu0
    %v1297 = vadd.f32 %v562, %v1296
    %1298 = vmatmul.f32.gmra.mxu0 %v1260
    %v1299 = vpop.f32.mrf.mxu0
    %v1300 = vadd.f32 %v562, %v1299
    %1301 = vmatmul.f32.gmra.mxu0 %v1262
    %v1302 = vpop.f32.mrf.mxu0
    %v1303 = vadd.f32 %v562, %v1302
    %1304 = vdwg.mxu0
    %1305 = vmatpush.msra.mxu0 %v245
    %1306 = vmatpush.msra.mxu0 %v242
    %1307 = vmatpush.msra.mxu0 %v239
    %1308 = vmatpush.msra.mxu0 %v236
    %1309 = vmatpush.msra.mxu0 %v233
    %1310 = vmatpush.msra.mxu0 %v230
    %1311 = vmatpush.msra.mxu0 %v227
    %1312 = vmatpush.msra.mxu0 %v224
    %1313 = vmatpush.msra.mxu0 %v221
    %1314 = vmatpush.msra.mxu0 %v218
    %1315 = vmatpush.msra.mxu0 %v215
    %1316 = vmatpush.msra.mxu0 %v212
    %1317 = vmatpush.msra.mxu0 %v209
    %1318 = vmatpush.msra.mxu0 %v206
    %1319 = vmatpush.msra.mxu0 %v203
    %1320 = vmatpush.msra.mxu0 %v200
    %1321 = vmatmul.f32.gmra.mxu0 %v1245
    %v1322 = vpop.f32.mrf.mxu0
    %v1323 = vadd.f32 %v563, %v1322
    %1324 = vmatmul.f32.gmra.mxu0 %v1247
    %v1325 = vpop.f32.mrf.mxu0
    %v1326 = vadd.f32 %v563, %v1325
    %1327 = vmatmul.f32.gmra.mxu0 %v1250
    %v1328 = vpop.f32.mrf.mxu0
    %v1329 = vadd.f32 %v563, %v1328
    %1330 = vmatmul.f32.gmra.mxu0 %v1252
    %v1331 = vpop.f32.mrf.mxu0
    %v1332 = vadd.f32 %v563, %v1331
    %1333 = vmatmul.f32.gmra.mxu0 %v1255
    %v1334 = vpop.f32.mrf.mxu0
    %v1335 = vadd.f32 %v563, %v1334
    %1336 = vmatmul.f32.gmra.mxu0 %v1257
    %v1337 = vpop.f32.mrf.mxu0
    %v1338 = vadd.f32 %v563, %v1337
    %1339 = vmatmul.f32.gmra.mxu0 %v1260
    %v1340 = vpop.f32.mrf.mxu0
    %v1341 = vadd.f32 %v563, %v1340
    %1342 = vmatmul.f32.gmra.mxu0 %v1262
    %v1343 = vpop.f32.mrf.mxu0
    %v1344 = vadd.f32 %v563, %v1343
    %1345 = vdwg.mxu0
    %1346 = vmatpush.msra.mxu0 %v246
    %1347 = vmatpush.msra.mxu0 %v243
    %1348 = vmatpush.msra.mxu0 %v240
    %1349 = vmatpush.msra.mxu0 %v237
    %1350 = vmatpush.msra.mxu0 %v234
    %1351 = vmatpush.msra.mxu0 %v231
    %1352 = vmatpush.msra.mxu0 %v228
    %1353 = vmatpush.msra.mxu0 %v225
    %1354 = vmatpush.msra.mxu0 %v222
    %1355 = vmatpush.msra.mxu0 %v219
    %1356 = vmatpush.msra.mxu0 %v216
    %1357 = vmatpush.msra.mxu0 %v213
    %1358 = vmatpush.msra.mxu0 %v210
    %1359 = vmatpush.msra.mxu0 %v207
    %1360 = vmatpush.msra.mxu0 %v204
    %1361 = vmatpush.msra.mxu0 %v201
    %1362 = vmatmul.f32.gmra.mxu0 %v1245
    %v1363 = vpop.f32.mrf.mxu0
    %v1364 = vadd.f32 %v564, %v1363
    %1365 = vmatmul.f32.gmra.mxu0 %v1247
    %v1366 = vpop.f32.mrf.mxu0
    %v1367 = vadd.f32 %v564, %v1366
    %1368 = vmatmul.f32.gmra.mxu0 %v1250
    %v1369 = vpop.f32.mrf.mxu0
    %v1370 = vadd.f32 %v564, %v1369
    %1371 = vmatmul.f32.gmra.mxu0 %v1252
    %v1372 = vpop.f32.mrf.mxu0
    %v1373 = vadd.f32 %v564, %v1372
    %1374 = vmatmul.f32.gmra.mxu0 %v1255
    %v1375 = vpop.f32.mrf.mxu0
    %v1376 = vadd.f32 %v564, %v1375
    %1377 = vmatmul.f32.gmra.mxu0 %v1257
    %v1378 = vpop.f32.mrf.mxu0
    %v1379 = vadd.f32 %v564, %v1378
    %1380 = vmatmul.f32.gmra.mxu0 %v1260
    %v1381 = vpop.f32.mrf.mxu0
    %v1382 = vadd.f32 %v564, %v1381
    %1383 = vmatmul.f32.gmra.mxu0 %v1262
    %v1384 = vpop.f32.mrf.mxu0
    %v1385 = vadd.f32 %v564, %v1384
    %1386 = vdwg.mxu0
    %v1387 = vadd.f32 %v1282, %v1126
    %v1388 = vadd.f32 %v1285, %v1129
    %v1389 = vadd.f32 %v1288, %v1132
    %v1390 = vadd.f32 %v1291, %v1135
    %v1391 = vadd.f32 %v1294, %v1138
    %v1392 = vadd.f32 %v1297, %v1141
    %v1393 = vadd.f32 %v1300, %v1144
    %v1394 = vadd.f32 %v1303, %v1147
    %v1395 = vxor.u32 %v1387, 2147483648
    %v1396 = vxor.u32 %v1388, 2147483648
    %v1397 = vxor.u32 %v1389, 2147483648
    %v1398 = vxor.u32 %v1390, 2147483648
    %v1399 = vxor.u32 %v1391, 2147483648
    %v1400 = vxor.u32 %v1392, 2147483648
    %v1401 = vxor.u32 %v1393, 2147483648
    %v1402 = vxor.u32 %v1394, 2147483648
    %v1403 = vmul.f32 %v1395, 1.442695
    %v1404 = vpow.pop %v1403
    %v1405 = vmul.f32 %v1396, 1.442695
    %v1406 = vpow.pop %v1405
    %v1407 = vmul.f32 %v1397, 1.442695
    %v1408 = vpow.pop %v1407
    %v1409 = vmul.f32 %v1398, 1.442695
    %v1410 = vpow.pop %v1409
    %v1411 = vmul.f32 %v1399, 1.442695
    %v1412 = vpow.pop %v1411
    %v1413 = vmul.f32 %v1400, 1.442695
    %v1414 = vpow.pop %v1413
    %v1415 = vmul.f32 %v1401, 1.442695
    %v1416 = vpow.pop %v1415
    %v1417 = vmul.f32 %v1402, 1.442695
    %v1418 = vpow.pop %v1417
    %v1419 = vadd.f32 %v1404, 1.0
    %v1420 = vadd.f32 %v1406, 1.0
    %v1421 = vadd.f32 %v1408, 1.0
    %v1422 = vadd.f32 %v1410, 1.0
    %v1423 = vadd.f32 %v1412, 1.0
    %v1424 = vadd.f32 %v1414, 1.0
    %v1425 = vadd.f32 %v1416, 1.0
    %v1426 = vadd.f32 %v1418, 1.0
    %v1427 = vrcp.pop %v1419
    %v1428 = vmul.f32 %v1419, %v1427
    %v1429 = vsub.f32 1.0, %v1428
    %v1430 = vmul.f32 %v1427, %v1429
    %v1431 = vadd.f32 %v1427, %v1430
    %vm1432 = vweird.f32 %v1419
    %vm1433 = vweird.f32 %v1427
    %vm1434 = vmor %vm1432, %vm1433
    %v1435 = vsel %vm1434, %v1427, %v1431
    %v1436 = vand.u32 2147483647, %v1419
    %vm1437 = vcmp.eq.f32.partialorder %v1436, 8.507059e+37
    %v1438 = vand.u32 %v1419, 2147483648
    %v1439 = vor.u32 1.1754944e-38, %v1438
    %v1440 = vsel %vm1437, %v1439, %v1435
    %v1441 = vmul.f32 1.0, %v1440
    %v1442 = vrcp.pop %v1420
    %v1443 = vmul.f32 %v1420, %v1442
    %v1444 = vsub.f32 1.0, %v1443
    %v1445 = vmul.f32 %v1442, %v1444
    %v1446 = vadd.f32 %v1442, %v1445
    %vm1447 = vweird.f32 %v1420
    %vm1448 = vweird.f32 %v1442
    %vm1449 = vmor %vm1447, %vm1448
    %v1450 = vsel %vm1449, %v1442, %v1446
    %v1451 = vand.u32 2147483647, %v1420
    %vm1452 = vcmp.eq.f32.partialorder %v1451, 8.507059e+37
    %v1453 = vand.u32 %v1420, 2147483648
    %v1454 = vor.u32 1.1754944e-38, %v1453
    %v1455 = vsel %vm1452, %v1454, %v1450
    %v1456 = vmul.f32 1.0, %v1455
    %v1457 = vrcp.pop %v1421
    %v1458 = vmul.f32 %v1421, %v1457
    %v1459 = vsub.f32 1.0, %v1458
    %v1460 = vmul.f32 %v1457, %v1459
    %v1461 = vadd.f32 %v1457, %v1460
    %vm1462 = vweird.f32 %v1421
    %vm1463 = vweird.f32 %v1457
    %vm1464 = vmor %vm1462, %vm1463
    %v1465 = vsel %vm1464, %v1457, %v1461
    %v1466 = vand.u32 2147483647, %v1421
    %vm1467 = vcmp.eq.f32.partialorder %v1466, 8.507059e+37
    %v1468 = vand.u32 %v1421, 2147483648
    %v1469 = vor.u32 1.1754944e-38, %v1468
    %v1470 = vsel %vm1467, %v1469, %v1465
    %v1471 = vmul.f32 1.0, %v1470
    %v1472 = vrcp.pop %v1422
    %v1473 = vmul.f32 %v1422, %v1472
    %v1474 = vsub.f32 1.0, %v1473
    %v1475 = vmul.f32 %v1472, %v1474
    %v1476 = vadd.f32 %v1472, %v1475
    %vm1477 = vweird.f32 %v1422
    %vm1478 = vweird.f32 %v1472
    %vm1479 = vmor %vm1477, %vm1478
    %v1480 = vsel %vm1479, %v1472, %v1476
    %v1481 = vand.u32 2147483647, %v1422
    %vm1482 = vcmp.eq.f32.partialorder %v1481, 8.507059e+37
    %v1483 = vand.u32 %v1422, 2147483648
    %v1484 = vor.u32 1.1754944e-38, %v1483
    %v1485 = vsel %vm1482, %v1484, %v1480
    %v1486 = vmul.f32 1.0, %v1485
    %v1487 = vrcp.pop %v1423
    %v1488 = vmul.f32 %v1423, %v1487
    %v1489 = vsub.f32 1.0, %v1488
    %v1490 = vmul.f32 %v1487, %v1489
    %v1491 = vadd.f32 %v1487, %v1490
    %vm1492 = vweird.f32 %v1423
    %vm1493 = vweird.f32 %v1487
    %vm1494 = vmor %vm1492, %vm1493
    %v1495 = vsel %vm1494, %v1487, %v1491
    %v1496 = vand.u32 2147483647, %v1423
    %vm1497 = vcmp.eq.f32.partialorder %v1496, 8.507059e+37
    %v1498 = vand.u32 %v1423, 2147483648
    %v1499 = vor.u32 1.1754944e-38, %v1498
    %v1500 = vsel %vm1497, %v1499, %v1495
    %v1501 = vmul.f32 1.0, %v1500
    %v1502 = vrcp.pop %v1424
    %v1503 = vmul.f32 %v1424, %v1502
    %v1504 = vsub.f32 1.0, %v1503
    %v1505 = vmul.f32 %v1502, %v1504
    %v1506 = vadd.f32 %v1502, %v1505
    %vm1507 = vweird.f32 %v1424
    %vm1508 = vweird.f32 %v1502
    %vm1509 = vmor %vm1507, %vm1508
    %v1510 = vsel %vm1509, %v1502, %v1506
    %v1511 = vand.u32 2147483647, %v1424
    %vm1512 = vcmp.eq.f32.partialorder %v1511, 8.507059e+37
    %v1513 = vand.u32 %v1424, 2147483648
    %v1514 = vor.u32 1.1754944e-38, %v1513
    %v1515 = vsel %vm1512, %v1514, %v1510
    %v1516 = vmul.f32 1.0, %v1515
    %v1517 = vrcp.pop %v1425
    %v1518 = vmul.f32 %v1425, %v1517
    %v1519 = vsub.f32 1.0, %v1518
    %v1520 = vmul.f32 %v1517, %v1519
    %v1521 = vadd.f32 %v1517, %v1520
    %vm1522 = vweird.f32 %v1425
    %vm1523 = vweird.f32 %v1517
    %vm1524 = vmor %vm1522, %vm1523
    %v1525 = vsel %vm1524, %v1517, %v1521
    %v1526 = vand.u32 2147483647, %v1425
    %vm1527 = vcmp.eq.f32.partialorder %v1526, 8.507059e+37
    %v1528 = vand.u32 %v1425, 2147483648
    %v1529 = vor.u32 1.1754944e-38, %v1528
    %v1530 = vsel %vm1527, %v1529, %v1525
    %v1531 = vmul.f32 1.0, %v1530
    %v1532 = vrcp.pop %v1426
    %v1533 = vmul.f32 %v1426, %v1532
    %v1534 = vsub.f32 1.0, %v1533
    %v1535 = vmul.f32 %v1532, %v1534
    %v1536 = vadd.f32 %v1532, %v1535
    %vm1537 = vweird.f32 %v1426
    %vm1538 = vweird.f32 %v1532
    %vm1539 = vmor %vm1537, %vm1538
    %v1540 = vsel %vm1539, %v1532, %v1536
    %v1541 = vand.u32 2147483647, %v1426
    %vm1542 = vcmp.eq.f32.partialorder %v1541, 8.507059e+37
    %v1543 = vand.u32 %v1426, 2147483648
    %v1544 = vor.u32 1.1754944e-38, %v1543
    %v1545 = vsel %vm1542, %v1544, %v1540
    %v1546 = vmul.f32 1.0, %v1545
    %v1547 = vadd.f32 %v1323, %v1167
    %v1548 = vadd.f32 %v1326, %v1170
    %v1549 = vadd.f32 %v1329, %v1173
    %v1550 = vadd.f32 %v1332, %v1176
    %v1551 = vadd.f32 %v1335, %v1179
    %v1552 = vadd.f32 %v1338, %v1182
    %v1553 = vadd.f32 %v1341, %v1185
    %v1554 = vadd.f32 %v1344, %v1188
    %v1555 = vxor.u32 %v1547, 2147483648
    %v1556 = vxor.u32 %v1548, 2147483648
    %v1557 = vxor.u32 %v1549, 2147483648
    %v1558 = vxor.u32 %v1550, 2147483648
    %v1559 = vxor.u32 %v1551, 2147483648
    %v1560 = vxor.u32 %v1552, 2147483648
    %v1561 = vxor.u32 %v1553, 2147483648
    %v1562 = vxor.u32 %v1554, 2147483648
    %v1563 = vmul.f32 %v1555, 1.442695
    %v1564 = vpow.pop %v1563
    %v1565 = vmul.f32 %v1556, 1.442695
    %v1566 = vpow.pop %v1565
    %v1567 = vmul.f32 %v1557, 1.442695
    %v1568 = vpow.pop %v1567
    %v1569 = vmul.f32 %v1558, 1.442695
    %v1570 = vpow.pop %v1569
    %v1571 = vmul.f32 %v1559, 1.442695
    %v1572 = vpow.pop %v1571
    %v1573 = vmul.f32 %v1560, 1.442695
    %v1574 = vpow.pop %v1573
    %v1575 = vmul.f32 %v1561, 1.442695
    %v1576 = vpow.pop %v1575
    %v1577 = vmul.f32 %v1562, 1.442695
    %v1578 = vpow.pop %v1577
    %v1579 = vadd.f32 %v1564, 1.0
    %v1580 = vadd.f32 %v1566, 1.0
    %v1581 = vadd.f32 %v1568, 1.0
    %v1582 = vadd.f32 %v1570, 1.0
    %v1583 = vadd.f32 %v1572, 1.0
    %v1584 = vadd.f32 %v1574, 1.0
    %v1585 = vadd.f32 %v1576, 1.0
    %v1586 = vadd.f32 %v1578, 1.0
    %v1587 = vrcp.pop %v1579
    %v1588 = vmul.f32 %v1579, %v1587
    %v1589 = vsub.f32 1.0, %v1588
    %v1590 = vmul.f32 %v1587, %v1589
    %v1591 = vadd.f32 %v1587, %v1590
    %vm1592 = vweird.f32 %v1579
    %vm1593 = vweird.f32 %v1587
    %vm1594 = vmor %vm1592, %vm1593
    %v1595 = vsel %vm1594, %v1587, %v1591
    %v1596 = vand.u32 2147483647, %v1579
    %vm1597 = vcmp.eq.f32.partialorder %v1596, 8.507059e+37
    %v1598 = vand.u32 %v1579, 2147483648
    %v1599 = vor.u32 1.1754944e-38, %v1598
    %v1600 = vsel %vm1597, %v1599, %v1595
    %v1601 = vmul.f32 1.0, %v1600
    %v1602 = vrcp.pop %v1580
    %v1603 = vmul.f32 %v1580, %v1602
    %v1604 = vsub.f32 1.0, %v1603
    %v1605 = vmul.f32 %v1602, %v1604
    %v1606 = vadd.f32 %v1602, %v1605
    %vm1607 = vweird.f32 %v1580
    %vm1608 = vweird.f32 %v1602
    %vm1609 = vmor %vm1607, %vm1608
    %v1610 = vsel %vm1609, %v1602, %v1606
    %v1611 = vand.u32 2147483647, %v1580
    %vm1612 = vcmp.eq.f32.partialorder %v1611, 8.507059e+37
    %v1613 = vand.u32 %v1580, 2147483648
    %v1614 = vor.u32 1.1754944e-38, %v1613
    %v1615 = vsel %vm1612, %v1614, %v1610
    %v1616 = vmul.f32 1.0, %v1615
    %v1617 = vrcp.pop %v1581
    %v1618 = vmul.f32 %v1581, %v1617
    %v1619 = vsub.f32 1.0, %v1618
    %v1620 = vmul.f32 %v1617, %v1619
    %v1621 = vadd.f32 %v1617, %v1620
    %vm1622 = vweird.f32 %v1581
    %vm1623 = vweird.f32 %v1617
    %vm1624 = vmor %vm1622, %vm1623
    %v1625 = vsel %vm1624, %v1617, %v1621
    %v1626 = vand.u32 2147483647, %v1581
    %vm1627 = vcmp.eq.f32.partialorder %v1626, 8.507059e+37
    %v1628 = vand.u32 %v1581, 2147483648
    %v1629 = vor.u32 1.1754944e-38, %v1628
    %v1630 = vsel %vm1627, %v1629, %v1625
    %v1631 = vmul.f32 1.0, %v1630
    %v1632 = vrcp.pop %v1582
    %v1633 = vmul.f32 %v1582, %v1632
    %v1634 = vsub.f32 1.0, %v1633
    %v1635 = vmul.f32 %v1632, %v1634
    %v1636 = vadd.f32 %v1632, %v1635
    %vm1637 = vweird.f32 %v1582
    %vm1638 = vweird.f32 %v1632
    %vm1639 = vmor %vm1637, %vm1638
    %v1640 = vsel %vm1639, %v1632, %v1636
    %v1641 = vand.u32 2147483647, %v1582
    %vm1642 = vcmp.eq.f32.partialorder %v1641, 8.507059e+37
    %v1643 = vand.u32 %v1582, 2147483648
    %v1644 = vor.u32 1.1754944e-38, %v1643
    %v1645 = vsel %vm1642, %v1644, %v1640
    %v1646 = vmul.f32 1.0, %v1645
    %v1647 = vrcp.pop %v1583
    %v1648 = vmul.f32 %v1583, %v1647
    %v1649 = vsub.f32 1.0, %v1648
    %v1650 = vmul.f32 %v1647, %v1649
    %v1651 = vadd.f32 %v1647, %v1650
    %vm1652 = vweird.f32 %v1583
    %vm1653 = vweird.f32 %v1647
    %vm1654 = vmor %vm1652, %vm1653
    %v1655 = vsel %vm1654, %v1647, %v1651
    %v1656 = vand.u32 2147483647, %v1583
    %vm1657 = vcmp.eq.f32.partialorder %v1656, 8.507059e+37
    %v1658 = vand.u32 %v1583, 2147483648
    %v1659 = vor.u32 1.1754944e-38, %v1658
    %v1660 = vsel %vm1657, %v1659, %v1655
    %v1661 = vmul.f32 1.0, %v1660
    %v1662 = vrcp.pop %v1584
    %v1663 = vmul.f32 %v1584, %v1662
    %v1664 = vsub.f32 1.0, %v1663
    %v1665 = vmul.f32 %v1662, %v1664
    %v1666 = vadd.f32 %v1662, %v1665
    %vm1667 = vweird.f32 %v1584
    %vm1668 = vweird.f32 %v1662
    %vm1669 = vmor %vm1667, %vm1668
    %v1670 = vsel %vm1669, %v1662, %v1666
    %v1671 = vand.u32 2147483647, %v1584
    %vm1672 = vcmp.eq.f32.partialorder %v1671, 8.507059e+37
    %v1673 = vand.u32 %v1584, 2147483648
    %v1674 = vor.u32 1.1754944e-38, %v1673
    %v1675 = vsel %vm1672, %v1674, %v1670
    %v1676 = vmul.f32 1.0, %v1675
    %v1677 = vrcp.pop %v1585
    %v1678 = vmul.f32 %v1585, %v1677
    %v1679 = vsub.f32 1.0, %v1678
    %v1680 = vmul.f32 %v1677, %v1679
    %v1681 = vadd.f32 %v1677, %v1680
    %vm1682 = vweird.f32 %v1585
    %vm1683 = vweird.f32 %v1677
    %vm1684 = vmor %vm1682, %vm1683
    %v1685 = vsel %vm1684, %v1677, %v1681
    %v1686 = vand.u32 2147483647, %v1585
    %vm1687 = vcmp.eq.f32.partialorder %v1686, 8.507059e+37
    %v1688 = vand.u32 %v1585, 2147483648
    %v1689 = vor.u32 1.1754944e-38, %v1688
    %v1690 = vsel %vm1687, %v1689, %v1685
    %v1691 = vmul.f32 1.0, %v1690
    %v1692 = vrcp.pop %v1586
    %v1693 = vmul.f32 %v1586, %v1692
    %v1694 = vsub.f32 1.0, %v1693
    %v1695 = vmul.f32 %v1692, %v1694
    %v1696 = vadd.f32 %v1692, %v1695
    %vm1697 = vweird.f32 %v1586
    %vm1698 = vweird.f32 %v1692
    %vm1699 = vmor %vm1697, %vm1698
    %v1700 = vsel %vm1699, %v1692, %v1696
    %v1701 = vand.u32 2147483647, %v1586
    %vm1702 = vcmp.eq.f32.partialorder %v1701, 8.507059e+37
    %v1703 = vand.u32 %v1586, 2147483648
    %v1704 = vor.u32 1.1754944e-38, %v1703
    %v1705 = vsel %vm1702, %v1704, %v1700
    %v1706 = vmul.f32 1.0, %v1705
    %v1707 = vmul.f32 %v1441, %v1208
    %v1708 = vmul.f32 %v1456, %v1211
    %v1709 = vmul.f32 %v1471, %v1214
    %v1710 = vmul.f32 %v1486, %v1217
    %v1711 = vmul.f32 %v1501, %v1220
    %v1712 = vmul.f32 %v1516, %v1223
    %v1713 = vmul.f32 %v1531, %v1226
    %v1714 = vmul.f32 %v1546, %v1229
    %v1715 = vadd.f32 %v1364, %v1707
    %v1716 = vadd.f32 %v1367, %v1708
    %v1717 = vadd.f32 %v1370, %v1709
    %v1718 = vadd.f32 %v1373, %v1710
    %v1719 = vadd.f32 %v1376, %v1711
    %v1720 = vadd.f32 %v1379, %v1712
    %v1721 = vadd.f32 %v1382, %v1713
    %v1722 = vadd.f32 %v1385, %v1714
    %v1723 = vtanh.pop %v1715
    %v1724 = vtanh.pop %v1716
    %v1725 = vtanh.pop %v1717
    %v1726 = vtanh.pop %v1718
    %v1727 = vtanh.pop %v1719
    %v1728 = vtanh.pop %v1720
    %v1729 = vtanh.pop %v1721
    %v1730 = vtanh.pop %v1722
    %v1731 = vsub.f32 1.0, %v1601
    %v1732 = vsub.f32 1.0, %v1616
    %v1733 = vsub.f32 1.0, %v1631
    %v1734 = vsub.f32 1.0, %v1646
    %v1735 = vsub.f32 1.0, %v1661
    %v1736 = vsub.f32 1.0, %v1676
    %v1737 = vsub.f32 1.0, %v1691
    %v1738 = vsub.f32 1.0, %v1706
    %v1739 = vmul.f32 %v1731, %v1723
    %v1740 = vmul.f32 %v1732, %v1724
    %v1741 = vmul.f32 %v1733, %v1725
    %v1742 = vmul.f32 %v1734, %v1726
    %v1743 = vmul.f32 %v1735, %v1727
    %v1744 = vmul.f32 %v1736, %v1728
    %v1745 = vmul.f32 %v1737, %v1729
    %v1746 = vmul.f32 %v1738, %v1730
    %v1747 = vmul.f32 %v1601, %v1059
    %v1748 = vmul.f32 %v1616, %v1060
    %v1749 = vmul.f32 %v1631, %v1061
    %v1750 = vmul.f32 %v1646, %v1062
    %v1751 = vmul.f32 %v1661, %v1063
    %v1752 = vmul.f32 %v1676, %v1064
    %v1753 = vmul.f32 %v1691, %v1065
    %v1754 = vmul.f32 %v1706, %v1066
    %v1755 = vadd.f32 %v1739, %v1747
    %v1756 = vadd.f32 %v1740, %v1748
    %v1757 = vadd.f32 %v1741, %v1749
    %v1758 = vadd.f32 %v1742, %v1750
    %v1759 = vadd.f32 %v1743, %v1751
    %v1760 = vadd.f32 %v1744, %v1752
    %v1761 = vadd.f32 %v1745, %v1753
    %v1762 = vadd.f32 %v1746, %v1754
    %1763 = vmatpush.msra.mxu0 %v194
    %1764 = vmatpush.msra.mxu0 %v190
    %1765 = vmatpush.msra.mxu0 %v186
    %1766 = vmatpush.msra.mxu0 %v182
    %1767 = vmatpush.msra.mxu0 %v178
    %1768 = vmatpush.msra.mxu0 %v174
    %1769 = vmatpush.msra.mxu0 %v170
    %1770 = vmatpush.msra.mxu0 %v166
    %1771 = vmatpush.msra.mxu0 %v162
    %1772 = vmatpush.msra.mxu0 %v158
    %1773 = vmatpush.msra.mxu0 %v154
    %1774 = vmatpush.msra.mxu0 %v150
    %1775 = vmatpush.msra.mxu0 %v146
    %1776 = vmatpush.msra.mxu0 %v142
    %1777 = vmatpush.msra.mxu0 %v138
    %1778 = vmatpush.msra.mxu0 %v134
    %1779 = vmatmul.f32.gmra.mxu0 %v1755
    %v1780 = vpop.f32.mrf.mxu0
    %v1781 = vadd.f32 %v343, %v1780
    %1782 = vmatmul.f32.gmra.mxu0 %v1756
    %v1783 = vpop.f32.mrf.mxu0
    %v1784 = vadd.f32 %v343, %v1783
    %1785 = vmatmul.f32.gmra.mxu0 %v1757
    %v1786 = vpop.f32.mrf.mxu0
    %v1787 = vadd.f32 %v343, %v1786
    %1788 = vmatmul.f32.gmra.mxu0 %v1758
    %v1789 = vpop.f32.mrf.mxu0
    %v1790 = vadd.f32 %v343, %v1789
    %1791 = vmatmul.f32.gmra.mxu0 %v1759
    %v1792 = vpop.f32.mrf.mxu0
    %v1793 = vadd.f32 %v343, %v1792
    %1794 = vmatmul.f32.gmra.mxu0 %v1760
    %v1795 = vpop.f32.mrf.mxu0
    %v1796 = vadd.f32 %v343, %v1795
    %1797 = vmatmul.f32.gmra.mxu0 %v1761
    %v1798 = vpop.f32.mrf.mxu0
    %v1799 = vadd.f32 %v343, %v1798
    %1800 = vmatmul.f32.gmra.mxu0 %v1762
    %v1801 = vpop.f32.mrf.mxu0
    %v1802 = vadd.f32 %v343, %v1801
    %1803 = vdwg.mxu0
    %1804 = vmatpush.msra.mxu0 %v195
    %1805 = vmatpush.msra.mxu0 %v191
    %1806 = vmatpush.msra.mxu0 %v187
    %1807 = vmatpush.msra.mxu0 %v183
    %1808 = vmatpush.msra.mxu0 %v179
    %1809 = vmatpush.msra.mxu0 %v175
    %1810 = vmatpush.msra.mxu0 %v171
    %1811 = vmatpush.msra.mxu0 %v167
    %1812 = vmatpush.msra.mxu0 %v163
    %1813 = vmatpush.msra.mxu0 %v159
    %1814 = vmatpush.msra.mxu0 %v155
    %1815 = vmatpush.msra.mxu0 %v151
    %1816 = vmatpush.msra.mxu0 %v147
    %1817 = vmatpush.msra.mxu0 %v143
    %1818 = vmatpush.msra.mxu0 %v139
    %1819 = vmatpush.msra.mxu0 %v135
    %1820 = vmatmul.f32.gmra.mxu0 %v1755
    %v1821 = vpop.f32.mrf.mxu0
    %v1822 = vadd.f32 %v344, %v1821
    %1823 = vmatmul.f32.gmra.mxu0 %v1756
    %v1824 = vpop.f32.mrf.mxu0
    %v1825 = vadd.f32 %v344, %v1824
    %1826 = vmatmul.f32.gmra.mxu0 %v1757
    %v1827 = vpop.f32.mrf.mxu0
    %v1828 = vadd.f32 %v344, %v1827
    %1829 = vmatmul.f32.gmra.mxu0 %v1758
    %v1830 = vpop.f32.mrf.mxu0
    %v1831 = vadd.f32 %v344, %v1830
    %1832 = vmatmul.f32.gmra.mxu0 %v1759
    %v1833 = vpop.f32.mrf.mxu0
    %v1834 = vadd.f32 %v344, %v1833
    %1835 = vmatmul.f32.gmra.mxu0 %v1760
    %v1836 = vpop.f32.mrf.mxu0
    %v1837 = vadd.f32 %v344, %v1836
    %1838 = vmatmul.f32.gmra.mxu0 %v1761
    %v1839 = vpop.f32.mrf.mxu0
    %v1840 = vadd.f32 %v344, %v1839
    %1841 = vmatmul.f32.gmra.mxu0 %v1762
    %v1842 = vpop.f32.mrf.mxu0
    %v1843 = vadd.f32 %v344, %v1842
    %1844 = vdwg.mxu0
    %1845 = vmatpush.msra.mxu0 %v196
    %1846 = vmatpush.msra.mxu0 %v192
    %1847 = vmatpush.msra.mxu0 %v188
    %1848 = vmatpush.msra.mxu0 %v184
    %1849 = vmatpush.msra.mxu0 %v180
    %1850 = vmatpush.msra.mxu0 %v176
    %1851 = vmatpush.msra.mxu0 %v172
    %1852 = vmatpush.msra.mxu0 %v168
    %1853 = vmatpush.msra.mxu0 %v164
    %1854 = vmatpush.msra.mxu0 %v160
    %1855 = vmatpush.msra.mxu0 %v156
    %1856 = vmatpush.msra.mxu0 %v152
    %1857 = vmatpush.msra.mxu0 %v148
    %1858 = vmatpush.msra.mxu0 %v144
    %1859 = vmatpush.msra.mxu0 %v140
    %1860 = vmatpush.msra.mxu0 %v136
    %1861 = vmatmul.f32.gmra.mxu0 %v1755
    %v1862 = vpop.f32.mrf.mxu0
    %v1863 = vadd.f32 %v345, %v1862
    %1864 = vmatmul.f32.gmra.mxu0 %v1756
    %v1865 = vpop.f32.mrf.mxu0
    %v1866 = vadd.f32 %v345, %v1865
    %1867 = vmatmul.f32.gmra.mxu0 %v1757
    %v1868 = vpop.f32.mrf.mxu0
    %v1869 = vadd.f32 %v345, %v1868
    %1870 = vmatmul.f32.gmra.mxu0 %v1758
    %v1871 = vpop.f32.mrf.mxu0
    %v1872 = vadd.f32 %v345, %v1871
    %1873 = vmatmul.f32.gmra.mxu0 %v1759
    %v1874 = vpop.f32.mrf.mxu0
    %v1875 = vadd.f32 %v345, %v1874
    %1876 = vmatmul.f32.gmra.mxu0 %v1760
    %v1877 = vpop.f32.mrf.mxu0
    %v1878 = vadd.f32 %v345, %v1877
    %1879 = vmatmul.f32.gmra.mxu0 %v1761
    %v1880 = vpop.f32.mrf.mxu0
    %v1881 = vadd.f32 %v345, %v1880
    %1882 = vmatmul.f32.gmra.mxu0 %v1762
    %v1883 = vpop.f32.mrf.mxu0
    %v1884 = vadd.f32 %v345, %v1883
    %1885 = vdwg.mxu0
    %1886 = vmatpush.msra.mxu0 %v197
    %1887 = vmatpush.msra.mxu0 %v193
    %1888 = vmatpush.msra.mxu0 %v189
    %1889 = vmatpush.msra.mxu0 %v185
    %1890 = vmatpush.msra.mxu0 %v181
    %1891 = vmatpush.msra.mxu0 %v177
    %1892 = vmatpush.msra.mxu0 %v173
    %1893 = vmatpush.msra.mxu0 %v169
    %1894 = vmatpush.msra.mxu0 %v165
    %1895 = vmatpush.msra.mxu0 %v161
    %1896 = vmatpush.msra.mxu0 %v157
    %1897 = vmatpush.msra.mxu0 %v153
    %1898 = vmatpush.msra.mxu0 %v149
    %1899 = vmatpush.msra.mxu0 %v145
    %1900 = vmatpush.msra.mxu0 %v141
    %1901 = vmatpush.msra.mxu0 %v137
    %1902 = vmatmul.f32.gmra.mxu0 %v1755
    %v1903 = vpop.f32.mrf.mxu0
    %v1904 = vadd.f32 %v346, %v1903
    %1905 = vmatmul.f32.gmra.mxu0 %v1756
    %v1906 = vpop.f32.mrf.mxu0
    %v1907 = vadd.f32 %v346, %v1906
    %1908 = vmatmul.f32.gmra.mxu0 %v1757
    %v1909 = vpop.f32.mrf.mxu0
    %v1910 = vadd.f32 %v346, %v1909
    %1911 = vmatmul.f32.gmra.mxu0 %v1758
    %v1912 = vpop.f32.mrf.mxu0
    %v1913 = vadd.f32 %v346, %v1912
    %1914 = vmatmul.f32.gmra.mxu0 %v1759
    %v1915 = vpop.f32.mrf.mxu0
    %v1916 = vadd.f32 %v346, %v1915
    %1917 = vmatmul.f32.gmra.mxu0 %v1760
    %v1918 = vpop.f32.mrf.mxu0
    %v1919 = vadd.f32 %v346, %v1918
    %1920 = vmatmul.f32.gmra.mxu0 %v1761
    %v1921 = vpop.f32.mrf.mxu0
    %v1922 = vadd.f32 %v346, %v1921
    %1923 = vmatmul.f32.gmra.mxu0 %v1762
    %v1924 = vpop.f32.mrf.mxu0
    %v1925 = vadd.f32 %v346, %v1924
    %1926 = vdwg.mxu0
    %v1927 = vpack.c.bf16 %v1784, %v1781
    %v1928 = vpack.c.bf16 %v1790, %v1787
    %v1929 = vpack.c.bf16 %v1796, %v1793
    %v1930 = vpack.c.bf16 %v1802, %v1799
    %1931 = vmatpush.bf16.msra.mxu0 0
    %1932 = vmatpush.bf16.msra.mxu0 0
    %1933 = vmatpush.bf16.msra.mxu0 0
    %1934 = vmatpush.bf16.msra.mxu0 0
    %1935 = vmatpush.bf16.msra.mxu0 %v1930
    %1936 = vmatpush.bf16.msra.mxu0 %v1929
    %1937 = vmatpush.bf16.msra.mxu0 %v1928
    %1938 = vmatpush.bf16.msra.mxu0 %v1927
    %1939 = vmatmul.bf16.gmra.mxu0 %v521
    %v1940 = vpop.f32.mrf.mxu0
    %v1941 = vadd.f32 0.0, %v1940
    %v1942 = vpop.f32.mrf.mxu0
    %v1943 = vadd.f32 0.0, %v1942
    %1944 = vmatmul.bf16.gmra.mxu0 %v524
    %v1945 = vpop.f32.mrf.mxu0
    %v1946 = vadd.f32 0.0, %v1945
    %v1947 = vpop.f32.mrf.mxu0
    %v1948 = vadd.f32 0.0, %v1947
    %1949 = vmatmul.bf16.gmra.mxu0 %v527
    %v1950 = vpop.f32.mrf.mxu0
    %v1951 = vadd.f32 0.0, %v1950
    %v1952 = vpop.f32.mrf.mxu0
    %v1953 = vadd.f32 0.0, %v1952
    %1954 = vmatmul.bf16.gmra.mxu0 %v530
    %v1955 = vpop.f32.mrf.mxu0
    %v1956 = vadd.f32 0.0, %v1955
    %v1957 = vpop.f32.mrf.mxu0
    %v1958 = vadd.f32 0.0, %v1957
    %1959 = vdwg.mxu0
    %1960 = vmatpush.msra.mxu0 %v244
    %1961 = vmatpush.msra.mxu0 %v241
    %1962 = vmatpush.msra.mxu0 %v238
    %1963 = vmatpush.msra.mxu0 %v235
    %1964 = vmatpush.msra.mxu0 %v232
    %1965 = vmatpush.msra.mxu0 %v229
    %1966 = vmatpush.msra.mxu0 %v226
    %1967 = vmatpush.msra.mxu0 %v223
    %1968 = vmatpush.msra.mxu0 %v220
    %1969 = vmatpush.msra.mxu0 %v217
    %1970 = vmatpush.msra.mxu0 %v214
    %1971 = vmatpush.msra.mxu0 %v211
    %1972 = vmatpush.msra.mxu0 %v208
    %1973 = vmatpush.msra.mxu0 %v205
    %1974 = vmatpush.msra.mxu0 %v202
    %1975 = vmatpush.msra.mxu0 %v199
    %1976 = vmatmul.f32.gmra.mxu0 %v1941
    %v1977 = vpop.f32.mrf.mxu0
    %v1978 = vadd.f32 %v562, %v1977
    %1979 = vmatmul.f32.gmra.mxu0 %v1943
    %v1980 = vpop.f32.mrf.mxu0
    %v1981 = vadd.f32 %v562, %v1980
    %1982 = vmatmul.f32.gmra.mxu0 %v1946
    %v1983 = vpop.f32.mrf.mxu0
    %v1984 = vadd.f32 %v562, %v1983
    %1985 = vmatmul.f32.gmra.mxu0 %v1948
    %v1986 = vpop.f32.mrf.mxu0
    %v1987 = vadd.f32 %v562, %v1986
    %1988 = vmatmul.f32.gmra.mxu0 %v1951
    %v1989 = vpop.f32.mrf.mxu0
    %v1990 = vadd.f32 %v562, %v1989
    %1991 = vmatmul.f32.gmra.mxu0 %v1953
    %v1992 = vpop.f32.mrf.mxu0
    %v1993 = vadd.f32 %v562, %v1992
    %1994 = vmatmul.f32.gmra.mxu0 %v1956
    %v1995 = vpop.f32.mrf.mxu0
    %v1996 = vadd.f32 %v562, %v1995
    %1997 = vmatmul.f32.gmra.mxu0 %v1958
    %v1998 = vpop.f32.mrf.mxu0
    %v1999 = vadd.f32 %v562, %v1998
    %2000 = vdwg.mxu0
    %2001 = vmatpush.msra.mxu0 %v245
    %2002 = vmatpush.msra.mxu0 %v242
    %2003 = vmatpush.msra.mxu0 %v239
    %2004 = vmatpush.msra.mxu0 %v236
    %2005 = vmatpush.msra.mxu0 %v233
    %2006 = vmatpush.msra.mxu0 %v230
    %2007 = vmatpush.msra.mxu0 %v227
    %2008 = vmatpush.msra.mxu0 %v224
    %2009 = vmatpush.msra.mxu0 %v221
    %2010 = vmatpush.msra.mxu0 %v218
    %2011 = vmatpush.msra.mxu0 %v215
    %2012 = vmatpush.msra.mxu0 %v212
    %2013 = vmatpush.msra.mxu0 %v209
    %2014 = vmatpush.msra.mxu0 %v206
    %2015 = vmatpush.msra.mxu0 %v203
    %2016 = vmatpush.msra.mxu0 %v200
    %2017 = vmatmul.f32.gmra.mxu0 %v1941
    %v2018 = vpop.f32.mrf.mxu0
    %v2019 = vadd.f32 %v563, %v2018
    %2020 = vmatmul.f32.gmra.mxu0 %v1943
    %v2021 = vpop.f32.mrf.mxu0
    %v2022 = vadd.f32 %v563, %v2021
    %2023 = vmatmul.f32.gmra.mxu0 %v1946
    %v2024 = vpop.f32.mrf.mxu0
    %v2025 = vadd.f32 %v563, %v2024
    %2026 = vmatmul.f32.gmra.mxu0 %v1948
    %v2027 = vpop.f32.mrf.mxu0
    %v2028 = vadd.f32 %v563, %v2027
    %2029 = vmatmul.f32.gmra.mxu0 %v1951
    %v2030 = vpop.f32.mrf.mxu0
    %v2031 = vadd.f32 %v563, %v2030
    %2032 = vmatmul.f32.gmra.mxu0 %v1953
    %v2033 = vpop.f32.mrf.mxu0
    %v2034 = vadd.f32 %v563, %v2033
    %2035 = vmatmul.f32.gmra.mxu0 %v1956
    %v2036 = vpop.f32.mrf.mxu0
    %v2037 = vadd.f32 %v563, %v2036
    %2038 = vmatmul.f32.gmra.mxu0 %v1958
    %v2039 = vpop.f32.mrf.mxu0
    %v2040 = vadd.f32 %v563, %v2039
    %2041 = vdwg.mxu0
    %2042 = vmatpush.msra.mxu0 %v246
    %2043 = vmatpush.msra.mxu0 %v243
    %2044 = vmatpush.msra.mxu0 %v240
    %2045 = vmatpush.msra.mxu0 %v237
    %2046 = vmatpush.msra.mxu0 %v234
    %2047 = vmatpush.msra.mxu0 %v231
    %2048 = vmatpush.msra.mxu0 %v228
    %2049 = vmatpush.msra.mxu0 %v225
    %2050 = vmatpush.msra.mxu0 %v222
    %2051 = vmatpush.msra.mxu0 %v219
    %2052 = vmatpush.msra.mxu0 %v216
    %2053 = vmatpush.msra.mxu0 %v213
    %2054 = vmatpush.msra.mxu0 %v210
    %2055 = vmatpush.msra.mxu0 %v207
    %2056 = vmatpush.msra.mxu0 %v204
    %2057 = vmatpush.msra.mxu0 %v201
    %2058 = vmatmul.f32.gmra.mxu0 %v1941
    %v2059 = vpop.f32.mrf.mxu0
    %v2060 = vadd.f32 %v564, %v2059
    %2061 = vmatmul.f32.gmra.mxu0 %v1943
    %v2062 = vpop.f32.mrf.mxu0
    %v2063 = vadd.f32 %v564, %v2062
    %2064 = vmatmul.f32.gmra.mxu0 %v1946
    %v2065 = vpop.f32.mrf.mxu0
    %v2066 = vadd.f32 %v564, %v2065
    %2067 = vmatmul.f32.gmra.mxu0 %v1948
    %v2068 = vpop.f32.mrf.mxu0
    %v2069 = vadd.f32 %v564, %v2068
    %2070 = vmatmul.f32.gmra.mxu0 %v1951
    %v2071 = vpop.f32.mrf.mxu0
    %v2072 = vadd.f32 %v564, %v2071
    %2073 = vmatmul.f32.gmra.mxu0 %v1953
    %v2074 = vpop.f32.mrf.mxu0
    %v2075 = vadd.f32 %v564, %v2074
    %2076 = vmatmul.f32.gmra.mxu0 %v1956
    %v2077 = vpop.f32.mrf.mxu0
    %v2078 = vadd.f32 %v564, %v2077
    %2079 = vmatmul.f32.gmra.mxu0 %v1958
    %v2080 = vpop.f32.mrf.mxu0
    %v2081 = vadd.f32 %v564, %v2080
    %2082 = vdwg.mxu0
    %v2083 = vadd.f32 %v1978, %v1822
    %v2084 = vadd.f32 %v1981, %v1825
    %v2085 = vadd.f32 %v1984, %v1828
    %v2086 = vadd.f32 %v1987, %v1831
    %v2087 = vadd.f32 %v1990, %v1834
    %v2088 = vadd.f32 %v1993, %v1837
    %v2089 = vadd.f32 %v1996, %v1840
    %v2090 = vadd.f32 %v1999, %v1843
    %v2091 = vxor.u32 %v2083, 2147483648
    %v2092 = vxor.u32 %v2084, 2147483648
    %v2093 = vxor.u32 %v2085, 2147483648
    %v2094 = vxor.u32 %v2086, 2147483648
    %v2095 = vxor.u32 %v2087, 2147483648
    %v2096 = vxor.u32 %v2088, 2147483648
    %v2097 = vxor.u32 %v2089, 2147483648
    %v2098 = vxor.u32 %v2090, 2147483648
    %v2099 = vmul.f32 %v2091, 1.442695
    %v2100 = vpow.pop %v2099
    %v2101 = vmul.f32 %v2092, 1.442695
    %v2102 = vpow.pop %v2101
    %v2103 = vmul.f32 %v2093, 1.442695
    %v2104 = vpow.pop %v2103
    %v2105 = vmul.f32 %v2094, 1.442695
    %v2106 = vpow.pop %v2105
    %v2107 = vmul.f32 %v2095, 1.442695
    %v2108 = vpow.pop %v2107
    %v2109 = vmul.f32 %v2096, 1.442695
    %v2110 = vpow.pop %v2109
    %v2111 = vmul.f32 %v2097, 1.442695
    %v2112 = vpow.pop %v2111
    %v2113 = vmul.f32 %v2098, 1.442695
    %v2114 = vpow.pop %v2113
    %v2115 = vadd.f32 %v2100, 1.0
    %v2116 = vadd.f32 %v2102, 1.0
    %v2117 = vadd.f32 %v2104, 1.0
    %v2118 = vadd.f32 %v2106, 1.0
    %v2119 = vadd.f32 %v2108, 1.0
    %v2120 = vadd.f32 %v2110, 1.0
    %v2121 = vadd.f32 %v2112, 1.0
    %v2122 = vadd.f32 %v2114, 1.0
    %v2123 = vrcp.pop %v2115
    %v2124 = vmul.f32 %v2115, %v2123
    %v2125 = vsub.f32 1.0, %v2124
    %v2126 = vmul.f32 %v2123, %v2125
    %v2127 = vadd.f32 %v2123, %v2126
    %vm2128 = vweird.f32 %v2115
    %vm2129 = vweird.f32 %v2123
    %vm2130 = vmor %vm2128, %vm2129
    %v2131 = vsel %vm2130, %v2123, %v2127
    %v2132 = vand.u32 2147483647, %v2115
    %vm2133 = vcmp.eq.f32.partialorder %v2132, 8.507059e+37
    %v2134 = vand.u32 %v2115, 2147483648
    %v2135 = vor.u32 1.1754944e-38, %v2134
    %v2136 = vsel %vm2133, %v2135, %v2131
    %v2137 = vmul.f32 1.0, %v2136
    %v2138 = vrcp.pop %v2116
    %v2139 = vmul.f32 %v2116, %v2138
    %v2140 = vsub.f32 1.0, %v2139
    %v2141 = vmul.f32 %v2138, %v2140
    %v2142 = vadd.f32 %v2138, %v2141
    %vm2143 = vweird.f32 %v2116
    %vm2144 = vweird.f32 %v2138
    %vm2145 = vmor %vm2143, %vm2144
    %v2146 = vsel %vm2145, %v2138, %v2142
    %v2147 = vand.u32 2147483647, %v2116
    %vm2148 = vcmp.eq.f32.partialorder %v2147, 8.507059e+37
    %v2149 = vand.u32 %v2116, 2147483648
    %v2150 = vor.u32 1.1754944e-38, %v2149
    %v2151 = vsel %vm2148, %v2150, %v2146
    %v2152 = vmul.f32 1.0, %v2151
    %v2153 = vrcp.pop %v2117
    %v2154 = vmul.f32 %v2117, %v2153
    %v2155 = vsub.f32 1.0, %v2154
    %v2156 = vmul.f32 %v2153, %v2155
    %v2157 = vadd.f32 %v2153, %v2156
    %vm2158 = vweird.f32 %v2117
    %vm2159 = vweird.f32 %v2153
    %vm2160 = vmor %vm2158, %vm2159
    %v2161 = vsel %vm2160, %v2153, %v2157
    %v2162 = vand.u32 2147483647, %v2117
    %vm2163 = vcmp.eq.f32.partialorder %v2162, 8.507059e+37
    %v2164 = vand.u32 %v2117, 2147483648
    %v2165 = vor.u32 1.1754944e-38, %v2164
    %v2166 = vsel %vm2163, %v2165, %v2161
    %v2167 = vmul.f32 1.0, %v2166
    %v2168 = vrcp.pop %v2118
    %v2169 = vmul.f32 %v2118, %v2168
    %v2170 = vsub.f32 1.0, %v2169
    %v2171 = vmul.f32 %v2168, %v2170
    %v2172 = vadd.f32 %v2168, %v2171
    %vm2173 = vweird.f32 %v2118
    %vm2174 = vweird.f32 %v2168
    %vm2175 = vmor %vm2173, %vm2174
    %v2176 = vsel %vm2175, %v2168, %v2172
    %v2177 = vand.u32 2147483647, %v2118
    %vm2178 = vcmp.eq.f32.partialorder %v2177, 8.507059e+37
    %v2179 = vand.u32 %v2118, 2147483648
    %v2180 = vor.u32 1.1754944e-38, %v2179
    %v2181 = vsel %vm2178, %v2180, %v2176
    %v2182 = vmul.f32 1.0, %v2181
    %v2183 = vrcp.pop %v2119
    %v2184 = vmul.f32 %v2119, %v2183
    %v2185 = vsub.f32 1.0, %v2184
    %v2186 = vmul.f32 %v2183, %v2185
    %v2187 = vadd.f32 %v2183, %v2186
    %vm2188 = vweird.f32 %v2119
    %vm2189 = vweird.f32 %v2183
    %vm2190 = vmor %vm2188, %vm2189
    %v2191 = vsel %vm2190, %v2183, %v2187
    %v2192 = vand.u32 2147483647, %v2119
    %vm2193 = vcmp.eq.f32.partialorder %v2192, 8.507059e+37
    %v2194 = vand.u32 %v2119, 2147483648
    %v2195 = vor.u32 1.1754944e-38, %v2194
    %v2196 = vsel %vm2193, %v2195, %v2191
    %v2197 = vmul.f32 1.0, %v2196
    %v2198 = vrcp.pop %v2120
    %v2199 = vmul.f32 %v2120, %v2198
    %v2200 = vsub.f32 1.0, %v2199
    %v2201 = vmul.f32 %v2198, %v2200
    %v2202 = vadd.f32 %v2198, %v2201
    %vm2203 = vweird.f32 %v2120
    %vm2204 = vweird.f32 %v2198
    %vm2205 = vmor %vm2203, %vm2204
    %v2206 = vsel %vm2205, %v2198, %v2202
    %v2207 = vand.u32 2147483647, %v2120
    %vm2208 = vcmp.eq.f32.partialorder %v2207, 8.507059e+37
    %v2209 = vand.u32 %v2120, 2147483648
    %v2210 = vor.u32 1.1754944e-38, %v2209
    %v2211 = vsel %vm2208, %v2210, %v2206
    %v2212 = vmul.f32 1.0, %v2211
    %v2213 = vrcp.pop %v2121
    %v2214 = vmul.f32 %v2121, %v2213
    %v2215 = vsub.f32 1.0, %v2214
    %v2216 = vmul.f32 %v2213, %v2215
    %v2217 = vadd.f32 %v2213, %v2216
    %vm2218 = vweird.f32 %v2121
    %vm2219 = vweird.f32 %v2213
    %vm2220 = vmor %vm2218, %vm2219
    %v2221 = vsel %vm2220, %v2213, %v2217
    %v2222 = vand.u32 2147483647, %v2121
    %vm2223 = vcmp.eq.f32.partialorder %v2222, 8.507059e+37
    %v2224 = vand.u32 %v2121, 2147483648
    %v2225 = vor.u32 1.1754944e-38, %v2224
    %v2226 = vsel %vm2223, %v2225, %v2221
    %v2227 = vmul.f32 1.0, %v2226
    %v2228 = vrcp.pop %v2122
    %v2229 = vmul.f32 %v2122, %v2228
    %v2230 = vsub.f32 1.0, %v2229
    %v2231 = vmul.f32 %v2228, %v2230
    %v2232 = vadd.f32 %v2228, %v2231
    %vm2233 = vweird.f32 %v2122
    %vm2234 = vweird.f32 %v2228
    %vm2235 = vmor %vm2233, %vm2234
    %v2236 = vsel %vm2235, %v2228, %v2232
    %v2237 = vand.u32 2147483647, %v2122
    %vm2238 = vcmp.eq.f32.partialorder %v2237, 8.507059e+37
    %v2239 = vand.u32 %v2122, 2147483648
    %v2240 = vor.u32 1.1754944e-38, %v2239
    %v2241 = vsel %vm2238, %v2240, %v2236
    %v2242 = vmul.f32 1.0, %v2241
    %v2243 = vadd.f32 %v2019, %v1863
    %v2244 = vadd.f32 %v2022, %v1866
    %v2245 = vadd.f32 %v2025, %v1869
    %v2246 = vadd.f32 %v2028, %v1872
    %v2247 = vadd.f32 %v2031, %v1875
    %v2248 = vadd.f32 %v2034, %v1878
    %v2249 = vadd.f32 %v2037, %v1881
    %v2250 = vadd.f32 %v2040, %v1884
    %v2251 = vxor.u32 %v2243, 2147483648
    %v2252 = vxor.u32 %v2244, 2147483648
    %v2253 = vxor.u32 %v2245, 2147483648
    %v2254 = vxor.u32 %v2246, 2147483648
    %v2255 = vxor.u32 %v2247, 2147483648
    %v2256 = vxor.u32 %v2248, 2147483648
    %v2257 = vxor.u32 %v2249, 2147483648
    %v2258 = vxor.u32 %v2250, 2147483648
    %v2259 = vmul.f32 %v2251, 1.442695
    %v2260 = vpow.pop %v2259
    %v2261 = vmul.f32 %v2252, 1.442695
    %v2262 = vpow.pop %v2261
    %v2263 = vmul.f32 %v2253, 1.442695
    %v2264 = vpow.pop %v2263
    %v2265 = vmul.f32 %v2254, 1.442695
    %v2266 = vpow.pop %v2265
    %v2267 = vmul.f32 %v2255, 1.442695
    %v2268 = vpow.pop %v2267
    %v2269 = vmul.f32 %v2256, 1.442695
    %v2270 = vpow.pop %v2269
    %v2271 = vmul.f32 %v2257, 1.442695
    %v2272 = vpow.pop %v2271
    %v2273 = vmul.f32 %v2258, 1.442695
    %v2274 = vpow.pop %v2273
    %v2275 = vadd.f32 %v2260, 1.0
    %v2276 = vadd.f32 %v2262, 1.0
    %v2277 = vadd.f32 %v2264, 1.0
    %v2278 = vadd.f32 %v2266, 1.0
    %v2279 = vadd.f32 %v2268, 1.0
    %v2280 = vadd.f32 %v2270, 1.0
    %v2281 = vadd.f32 %v2272, 1.0
    %v2282 = vadd.f32 %v2274, 1.0
    %v2283 = vrcp.pop %v2275
    %v2284 = vmul.f32 %v2275, %v2283
    %v2285 = vsub.f32 1.0, %v2284
    %v2286 = vmul.f32 %v2283, %v2285
    %v2287 = vadd.f32 %v2283, %v2286
    %vm2288 = vweird.f32 %v2275
    %vm2289 = vweird.f32 %v2283
    %vm2290 = vmor %vm2288, %vm2289
    %v2291 = vsel %vm2290, %v2283, %v2287
    %v2292 = vand.u32 2147483647, %v2275
    %vm2293 = vcmp.eq.f32.partialorder %v2292, 8.507059e+37
    %v2294 = vand.u32 %v2275, 2147483648
    %v2295 = vor.u32 1.1754944e-38, %v2294
    %v2296 = vsel %vm2293, %v2295, %v2291
    %v2297 = vmul.f32 1.0, %v2296
    %v2298 = vrcp.pop %v2276
    %v2299 = vmul.f32 %v2276, %v2298
    %v2300 = vsub.f32 1.0, %v2299
    %v2301 = vmul.f32 %v2298, %v2300
    %v2302 = vadd.f32 %v2298, %v2301
    %vm2303 = vweird.f32 %v2276
    %vm2304 = vweird.f32 %v2298
    %vm2305 = vmor %vm2303, %vm2304
    %v2306 = vsel %vm2305, %v2298, %v2302
    %v2307 = vand.u32 2147483647, %v2276
    %vm2308 = vcmp.eq.f32.partialorder %v2307, 8.507059e+37
    %v2309 = vand.u32 %v2276, 2147483648
    %v2310 = vor.u32 1.1754944e-38, %v2309
    %v2311 = vsel %vm2308, %v2310, %v2306
    %v2312 = vmul.f32 1.0, %v2311
    %v2313 = vrcp.pop %v2277
    %v2314 = vmul.f32 %v2277, %v2313
    %v2315 = vsub.f32 1.0, %v2314
    %v2316 = vmul.f32 %v2313, %v2315
    %v2317 = vadd.f32 %v2313, %v2316
    %vm2318 = vweird.f32 %v2277
    %vm2319 = vweird.f32 %v2313
    %vm2320 = vmor %vm2318, %vm2319
    %v2321 = vsel %vm2320, %v2313, %v2317
    %v2322 = vand.u32 2147483647, %v2277
    %vm2323 = vcmp.eq.f32.partialorder %v2322, 8.507059e+37
    %v2324 = vand.u32 %v2277, 2147483648
    %v2325 = vor.u32 1.1754944e-38, %v2324
    %v2326 = vsel %vm2323, %v2325, %v2321
    %v2327 = vmul.f32 1.0, %v2326
    %v2328 = vrcp.pop %v2278
    %v2329 = vmul.f32 %v2278, %v2328
    %v2330 = vsub.f32 1.0, %v2329
    %v2331 = vmul.f32 %v2328, %v2330
    %v2332 = vadd.f32 %v2328, %v2331
    %vm2333 = vweird.f32 %v2278
    %vm2334 = vweird.f32 %v2328
    %vm2335 = vmor %vm2333, %vm2334
    %v2336 = vsel %vm2335, %v2328, %v2332
    %v2337 = vand.u32 2147483647, %v2278
    %vm2338 = vcmp.eq.f32.partialorder %v2337, 8.507059e+37
    %v2339 = vand.u32 %v2278, 2147483648
    %v2340 = vor.u32 1.1754944e-38, %v2339
    %v2341 = vsel %vm2338, %v2340, %v2336
    %v2342 = vmul.f32 1.0, %v2341
    %v2343 = vrcp.pop %v2279
    %v2344 = vmul.f32 %v2279, %v2343
    %v2345 = vsub.f32 1.0, %v2344
    %v2346 = vmul.f32 %v2343, %v2345
    %v2347 = vadd.f32 %v2343, %v2346
    %vm2348 = vweird.f32 %v2279
    %vm2349 = vweird.f32 %v2343
    %vm2350 = vmor %vm2348, %vm2349
    %v2351 = vsel %vm2350, %v2343, %v2347
    %v2352 = vand.u32 2147483647, %v2279
    %vm2353 = vcmp.eq.f32.partialorder %v2352, 8.507059e+37
    %v2354 = vand.u32 %v2279, 2147483648
    %v2355 = vor.u32 1.1754944e-38, %v2354
    %v2356 = vsel %vm2353, %v2355, %v2351
    %v2357 = vmul.f32 1.0, %v2356
    %v2358 = vrcp.pop %v2280
    %v2359 = vmul.f32 %v2280, %v2358
    %v2360 = vsub.f32 1.0, %v2359
    %v2361 = vmul.f32 %v2358, %v2360
    %v2362 = vadd.f32 %v2358, %v2361
    %vm2363 = vweird.f32 %v2280
    %vm2364 = vweird.f32 %v2358
    %vm2365 = vmor %vm2363, %vm2364
    %v2366 = vsel %vm2365, %v2358, %v2362
    %v2367 = vand.u32 2147483647, %v2280
    %vm2368 = vcmp.eq.f32.partialorder %v2367, 8.507059e+37
    %v2369 = vand.u32 %v2280, 2147483648
    %v2370 = vor.u32 1.1754944e-38, %v2369
    %v2371 = vsel %vm2368, %v2370, %v2366
    %v2372 = vmul.f32 1.0, %v2371
    %v2373 = vrcp.pop %v2281
    %v2374 = vmul.f32 %v2281, %v2373
    %v2375 = vsub.f32 1.0, %v2374
    %v2376 = vmul.f32 %v2373, %v2375
    %v2377 = vadd.f32 %v2373, %v2376
    %vm2378 = vweird.f32 %v2281
    %vm2379 = vweird.f32 %v2373
    %vm2380 = vmor %vm2378, %vm2379
    %v2381 = vsel %vm2380, %v2373, %v2377
    %v2382 = vand.u32 2147483647, %v2281
    %vm2383 = vcmp.eq.f32.partialorder %v2382, 8.507059e+37
    %v2384 = vand.u32 %v2281, 2147483648
    %v2385 = vor.u32 1.1754944e-38, %v2384
    %v2386 = vsel %vm2383, %v2385, %v2381
    %v2387 = vmul.f32 1.0, %v2386
    %v2388 = vrcp.pop %v2282
    %v2389 = vmul.f32 %v2282, %v2388
    %v2390 = vsub.f32 1.0, %v2389
    %v2391 = vmul.f32 %v2388, %v2390
    %v2392 = vadd.f32 %v2388, %v2391
    %vm2393 = vweird.f32 %v2282
    %vm2394 = vweird.f32 %v2388
    %vm2395 = vmor %vm2393, %vm2394
    %v2396 = vsel %vm2395, %v2388, %v2392
    %v2397 = vand.u32 2147483647, %v2282
    %vm2398 = vcmp.eq.f32.partialorder %v2397, 8.507059e+37
    %v2399 = vand.u32 %v2282, 2147483648
    %v2400 = vor.u32 1.1754944e-38, %v2399
    %v2401 = vsel %vm2398, %v2400, %v2396
    %v2402 = vmul.f32 1.0, %v2401
    %v2403 = vmul.f32 %v2137, %v1904
    %v2404 = vmul.f32 %v2152, %v1907
    %v2405 = vmul.f32 %v2167, %v1910
    %v2406 = vmul.f32 %v2182, %v1913
    %v2407 = vmul.f32 %v2197, %v1916
    %v2408 = vmul.f32 %v2212, %v1919
    %v2409 = vmul.f32 %v2227, %v1922
    %v2410 = vmul.f32 %v2242, %v1925
    %v2411 = vadd.f32 %v2060, %v2403
    %v2412 = vadd.f32 %v2063, %v2404
    %v2413 = vadd.f32 %v2066, %v2405
    %v2414 = vadd.f32 %v2069, %v2406
    %v2415 = vadd.f32 %v2072, %v2407
    %v2416 = vadd.f32 %v2075, %v2408
    %v2417 = vadd.f32 %v2078, %v2409
    %v2418 = vadd.f32 %v2081, %v2410
    %v2419 = vtanh.pop %v2411
    %v2420 = vtanh.pop %v2412
    %v2421 = vtanh.pop %v2413
    %v2422 = vtanh.pop %v2414
    %v2423 = vtanh.pop %v2415
    %v2424 = vtanh.pop %v2416
    %v2425 = vtanh.pop %v2417
    %v2426 = vtanh.pop %v2418
    %v2427 = vsub.f32 1.0, %v2297
    %v2428 = vsub.f32 1.0, %v2312
    %v2429 = vsub.f32 1.0, %v2327
    %v2430 = vsub.f32 1.0, %v2342
    %v2431 = vsub.f32 1.0, %v2357
    %v2432 = vsub.f32 1.0, %v2372
    %v2433 = vsub.f32 1.0, %v2387
    %v2434 = vsub.f32 1.0, %v2402
    %v2435 = vmul.f32 %v2427, %v2419
    %v2436 = vmul.f32 %v2428, %v2420
    %v2437 = vmul.f32 %v2429, %v2421
    %v2438 = vmul.f32 %v2430, %v2422
    %v2439 = vmul.f32 %v2431, %v2423
    %v2440 = vmul.f32 %v2432, %v2424
    %v2441 = vmul.f32 %v2433, %v2425
    %v2442 = vmul.f32 %v2434, %v2426
    %v2443 = vmul.f32 %v2297, %v1755
    %v2444 = vmul.f32 %v2312, %v1756
    %v2445 = vmul.f32 %v2327, %v1757
    %v2446 = vmul.f32 %v2342, %v1758
    %v2447 = vmul.f32 %v2357, %v1759
    %v2448 = vmul.f32 %v2372, %v1760
    %v2449 = vmul.f32 %v2387, %v1761
    %v2450 = vmul.f32 %v2402, %v1762
    %v2451 = vadd.f32 %v2435, %v2443
    %v2452 = vadd.f32 %v2436, %v2444
    %v2453 = vadd.f32 %v2437, %v2445
    %v2454 = vadd.f32 %v2438, %v2446
    %v2455 = vadd.f32 %v2439, %v2447
    %v2456 = vadd.f32 %v2440, %v2448
    %v2457 = vadd.f32 %v2441, %v2449
    %v2458 = vadd.f32 %v2442, %v2450
    %v2460 = vperm.slane %v264, 0
    %2462 = vmatpush.msra.mxu0 %v263
    %2463 = vmatpush.msra.mxu0 %v262
    %2464 = vmatpush.msra.mxu0 %v261
    %2465 = vmatpush.msra.mxu0 %v260
    %2466 = vmatpush.msra.mxu0 %v259
    %2467 = vmatpush.msra.mxu0 %v258
    %2468 = vmatpush.msra.mxu0 %v257
    %2469 = vmatpush.msra.mxu0 %v256
    %2470 = vmatpush.msra.mxu0 %v255
    %2471 = vmatpush.msra.mxu0 %v254
    %2472 = vmatpush.msra.mxu0 %v253
    %2473 = vmatpush.msra.mxu0 %v252
    %2474 = vmatpush.msra.mxu0 %v251
    %2475 = vmatpush.msra.mxu0 %v250
    %2476 = vmatpush.msra.mxu0 %v249
    %2477 = vmatpush.msra.mxu0 %v248
    %2478 = vmatmul.f32.gmra.mxu0 %v2451
    %v2479 = vpop.f32.mrf.mxu0
    %v2480 = vadd.f32 %v2460, %v2479
    %2481 = vmatmul.f32.gmra.mxu0 %v2452
    %v2482 = vpop.f32.mrf.mxu0
    %v2483 = vadd.f32 %v2460, %v2482
    %2484 = vmatmul.f32.gmra.mxu0 %v2453
    %v2485 = vpop.f32.mrf.mxu0
    %v2486 = vadd.f32 %v2460, %v2485
    %2487 = vmatmul.f32.gmra.mxu0 %v2454
    %v2488 = vpop.f32.mrf.mxu0
    %v2489 = vadd.f32 %v2460, %v2488
    %2490 = vmatmul.f32.gmra.mxu0 %v2455
    %v2491 = vpop.f32.mrf.mxu0
    %v2492 = vadd.f32 %v2460, %v2491
    %2493 = vmatmul.f32.gmra.mxu0 %v2456
    %v2494 = vpop.f32.mrf.mxu0
    %v2495 = vadd.f32 %v2460, %v2494
    %2496 = vmatmul.f32.gmra.mxu0 %v2457
    %v2497 = vpop.f32.mrf.mxu0
    %v2498 = vadd.f32 %v2460, %v2497
    %2499 = vmatmul.f32.gmra.mxu0 %v2458
    %v2500 = vpop.f32.mrf.mxu0
    %v2501 = vadd.f32 %v2460, %v2500
    %2502 = vdwg.mxu0
    %2503 = vst [vmem:[#allocation11] sm:$0xff] %v2480
    %2504 = vst [vmem:[#allocation11 + $0x8] sm:$0xff] %v2483
    %2505 = vst [vmem:[#allocation11 + $0x10] sm:$0xff] %v2486
    %2506 = vst [vmem:[#allocation11 + $0x18] sm:$0xff] %v2489
    %2507 = vst [vmem:[#allocation11 + $0x20] sm:$0xff] %v2492
    %2508 = vst [vmem:[#allocation11 + $0x28] sm:$0xff] %v2495
    %2509 = vst [vmem:[#allocation11 + $0x30] sm:$0xff] %v2498
    %2510 = vst [vmem:[#allocation11 + $0x38] sm:$0xff] %v2501
    // Predicated region
    $region62: #{tpu_custom_call.1} parent=1 // pred_check
      _
    $region63: #{tpu_custom_call.1} parent=1 // pred_check_branch
      %2512 = sbr.rel (0) target = $region65
    $region64: #{tpu_custom_call.1} parent=1 // pred_region
      %2514 = vsyncadd [#allocation4], 0
      %s2515 = sshll.u32 [#allocation11], 4
      %s2516 = int_to_ptr.vmem [resolvable:$true] %s2515
      %s2517 = sshll.u32 %s10, 4
      %s2518 = int_to_ptr.hbm [resolvable:$true] %s2517
      %2523 = dma.vmem_to_hbm [thread:$0]  %s2516, 1024, %s2518, [#allocation4], 128, 128, 8
    $region65: #{tpu_custom_call.1} parent=1 // pred_fallthru
      _
    // Predicated region
    $region66: #{tpu_custom_call.1} parent=1 // pred_check
      _
    $region67: #{tpu_custom_call.1} parent=1 // pred_check_branch
      %2525 = sbr.rel (0) target = $region69
    $region68: #{tpu_custom_call.1} parent=1 // pred_region
      %2527 = dma.done [#allocation4], 1024
    $region69: #{tpu_custom_call.1} parent=1 // pred_fallthru
      _
    %2528 = vsyncpa [#allocation3], 1
    %2529 = vsyncpa [#allocation6], 1
    %2530 = vsyncpa [#allocation9], 1
    %2531 = vsyncpa [#allocation4], 1

</llo_original>
